<compile_context>
chip_gen: v7x
topology: tpu7x:2x2x1
jax: 0.10.0
libtpu: 0.0.40
codegen_flags: <defaults>
</compile_context>

<pallas_src>
import functools

import jax
import jax.numpy as jnp
from jax.experimental import pallas as pl
from jax.experimental.pallas import tpu as pltpu


def _map_attention_kernel(seed_ref, x_ref, wq_t_ref, wkv_t_ref, wp_t_ref, bp_ref,
                          out_ref, *, n_heads, head_dim, scale, compute_dtype):
    # seed_ref: (BB, K, C)   x_ref: (BB, N, C)
    # wq_t_ref: (C, C)   wkv_t_ref: (C, 2C)   wp_t_ref: (C, C)   bp_ref: (1, C)
    BB, K, C = seed_ref.shape
    _, N, _ = x_ref.shape
    cdt = compute_dtype

    # ---- projections: flatten folded batches into MXU rows ------------------
    seed2 = seed_ref[...].reshape(BB * K, C).astype(cdt)
    x2 = x_ref[...].reshape(BB * N, C).astype(cdt)

    # Weights are already transposed ((in, out) layout) -> plain row-major dots.
    q_full = jnp.dot(seed2, wq_t_ref[...], preferred_element_type=jnp.float32)   # (BB*K, C)
    kv_full = jnp.dot(x2, wkv_t_ref[...], preferred_element_type=jnp.float32)    # (BB*N, 2C)

    # Scale q once (touches only (BB*K, C)); equivalent to scaling k or scores.
    q = (q_full * scale).reshape(BB, K, C)
    k = kv_full[:, :C].reshape(BB, N, C)
    v = kv_full[:, C:].reshape(BB, N, C)

    # ---- per-head attention with the output projection fused in -------------
    acc = jnp.zeros((BB * K, C), dtype=jnp.float32)
    for h in range(n_heads):                      # static, unrolled (n_heads small)
        lo = h * head_dim
        hi = lo + head_dim
        qh = q[:, :, lo:hi].astype(cdt)           # (BB, K, D)  lane slice (read only)
        kh = k[:, :, lo:hi].astype(cdt)           # (BB, N, D)
        vh = v[:, :, lo:hi]                       # (BB, N, D)  f32

        # scores = q_h @ k_h^T expressed via contraction dims (no materialized .T)
        s = jnp.einsum('bkd,bnd->bkn', qh, kh,
                       preferred_element_type=jnp.float32)        # (BB, K, N)

        # softmax over N in f32 (VPU/EUP path stays f32 on all generations)
        m = jnp.max(s, axis=-1, keepdims=True)
        p = jnp.exp(s - m)
        denom = jnp.sum(p, axis=-1, keepdims=True)
        attn = p * pl.reciprocal(denom, approx=True)              # EUP slot

        oh = jnp.einsum('bkn,bnd->bkd', attn.astype(cdt), vh.astype(cdt),
                        preferred_element_type=jnp.float32)       # (BB, K, D)

        # Fused output projection for this head: lane-dense (BB*K, C) update,
        # replaces the old vals.at[:, lo:hi].set(...) masked writes.
        acc = acc + jnp.dot(oh.reshape(BB * K, head_dim).astype(cdt),
                            wp_t_ref[lo:hi, :],
                            preferred_element_type=jnp.float32)

    out = acc + bp_ref[...]                       # (BB*K, C) + (1, C) broadcast
    out_ref[...] = out.reshape(BB, K, C).astype(out_ref.dtype)


def map_attention(seed, x, wq, wkv, wp, bp, *, n_heads, batch_block=None,
                  compute_dtype=jnp.bfloat16):
    """MAPAttention forward. Weights use nn.Linear (out, in) convention."""
    B, K, C = seed.shape
    Bx, N, Cx = x.shape
    assert B == Bx and C == Cx
    assert C % n_heads == 0
    head_dim = C // n_heads
    scale = float(head_dim) ** -0.5

    # ---- choose the batch block (BB batches per grid step) ------------------
    if batch_block is None:
        target_rows = 256                      # fill the 256-wide MXU (v6e/v7x)
        bb = max(1, min(B, target_rows // max(K, 1)))
        if B >= 2:
            bb = max(1, min(bb, B // 2))       # keep >=2 grid steps (v7x megacore)
        while B % bb != 0:
            bb -= 1
        batch_block = bb
    BB = batch_block
    assert B % BB == 0

    # ---- host-side, one-time weight prep (grid-invariant) -------------------
    wq_t = wq.T.astype(compute_dtype)          # (C, C)   (in -> out)
    wkv_t = wkv.T.astype(compute_dtype)        # (C, 2C)
    wp_t = wp.T.astype(compute_dtype)          # (C, C)
    bp2d = bp.reshape(1, C).astype(jnp.float32)

    kernel = functools.partial(
        _map_attention_kernel, n_heads=n_heads, head_dim=head_dim,
        scale=scale, compute_dtype=compute_dtype)

    # Note: the three weight BlockSpecs use a constant index_map, so their tiles
    # are fetched once and stay resident across the (sequential) batch grid.
    return pl.pallas_call(
        kernel,
        out_shape=jax.ShapeDtypeStruct((B, K, C), seed.dtype),
        grid_spec=pltpu.PrefetchScalarGridSpec(
            num_scalar_prefetch=0,
            grid=(B // BB,),
            in_specs=[
                pl.BlockSpec((BB, K, C), lambda b: (b, 0, 0)),     # seed block
                pl.BlockSpec((BB, N, C), lambda b: (b, 0, 0)),     # x block
                pl.BlockSpec((C, C), lambda b: (0, 0)),            # Wq^T
                pl.BlockSpec((C, 2 * C), lambda b: (0, 0)),        # Wkv^T
                pl.BlockSpec((C, C), lambda b: (0, 0)),            # Wp^T
                pl.BlockSpec((1, C), lambda b: (0, 0)),            # proj bias
            ],
            out_specs=pl.BlockSpec((BB, K, C), lambda b: (b, 0, 0)),
        ),
        compiler_params=pltpu.CompilerParams(
            dimension_semantics=("parallel",),
            # Explicit VMEM budget (leaves headroom under v7x's 64 MiB/TC).
            vmem_limit_bytes=48 * 1024 * 1024,
        ),
    )(seed, x, wq_t, wkv_t, wp_t, bp2d)


def map_attention_ref(seed, x, wq, wkv, wp, bp, *, n_heads):
    """Pure-JAX reference mirroring the PyTorch forward."""
    B, K, C = seed.shape
    _, N, _ = x.shape
    D = C // n_heads
    scale = float(D) ** -0.5
    q = (seed @ wq.T).reshape(B, K, n_heads, D).transpose(0, 2, 1, 3)       # (B,H,K,D)
    kv = (x @ wkv.T).reshape(B, N, 2, n_heads, D).transpose(2, 0, 3, 1, 4)  # (2,B,H,N,D)
    k, v = kv[0], kv[1]
    scores = jnp.einsum("bhkd,bhnd->bhkn", q, k * scale)
    attn = jax.nn.softmax(scores, axis=-1)
    vals = jnp.einsum("bhkn,bhnd->bhkd", attn, v).transpose(0, 2, 1, 3).reshape(B, K, C)
    return vals @ wp.T + bp[None, None, :]


if __name__ == "__main__":
    B, K, N, C, H = 4, 8, 16, 32, 4   # embed_dim=32, n_heads=4 -> head_dim=8

    key = jax.random.PRNGKey(0)
    ks = jax.random.split(key, 6)
    seed_t = jax.random.normal(ks[0], (B, K, C), dtype=jnp.float32)
    x_t = jax.random.normal(ks[1], (B, N, C), dtype=jnp.float32)
    # deterministic synthetic parameters (nn.Linear weight shapes: (out, in))
    wq = jax.random.normal(ks[2], (C, C), dtype=jnp.float32) * 0.1
    wkv = jax.random.normal(ks[3], (2 * C, C), dtype=jnp.float32) * 0.1
    wp = jax.random.normal(ks[4], (C, C), dtype=jnp.float32) * 0.1
    bp = jax.random.normal(ks[5], (C,), dtype=jnp.float32) * 0.1

    ref = map_attention_ref(seed_t, x_t, wq, wkv, wp, bp, n_heads=H)

    # Default (bf16 MXU operands, f32 accumulation / softmax) — the perf path.
    out = map_attention(seed_t, x_t, wq, wkv, wp, bp, n_heads=H)
    out = jax.block_until_ready(out)
    assert out.shape == (B, K, C)
    assert jnp.allclose(out, ref, atol=5e-2, rtol=5e-2), "bf16 kernel mismatch vs reference"

    # Full-f32 compute path: tight structural-correctness check.
    out_f32 = map_attention(seed_t, x_t, wq, wkv, wp, bp, n_heads=H,
                            compute_dtype=jnp.float32)
    out_f32 = jax.block_until_ready(out_f32)
    assert jnp.allclose(out_f32, ref, atol=5e-3, rtol=5e-3), "f32 kernel mismatch vs reference"

    print("KERNEL_OK")
</pallas_src>

<mosaic_0001>
module attributes {stable_mosaic.version = 11 : i64} {
  func.func @_map_attention_kernel(%arg0: i32, %arg1: memref<2x8x32xf32, #tpu.memory_space<vmem>>, %arg2: memref<2x16x32xf32, #tpu.memory_space<vmem>>, %arg3: memref<32x32xbf16, #tpu.memory_space<vmem>>, %arg4: memref<32x64xbf16, #tpu.memory_space<vmem>>, %arg5: memref<32x32xbf16, #tpu.memory_space<vmem>>, %arg6: memref<1x32xf32, #tpu.memory_space<vmem>>, %arg7: memref<2x8x32xf32, #tpu.memory_space<vmem>>) attributes {dimension_semantics = [#tpu.dimension_semantics<parallel>], iteration_bounds = array<i64: 2>, scalar_prefetch = 0 : i64, scratch_operands = 0 : i64, tpu.core_type = #tpu.core_type<tc>, window_params = [{transform_indices = @transform_0, window_bounds = array<i64: 2, 8, 32>}, {transform_indices = @transform_1, window_bounds = array<i64: 2, 16, 32>}, {pipeline_mode = #tpu.pipeline_mode<synchronous>, transform_indices = @transform_2, window_bounds = array<i64: 32, 32>}, {pipeline_mode = #tpu.pipeline_mode<synchronous>, transform_indices = @transform_3, window_bounds = array<i64: 32, 64>}, {pipeline_mode = #tpu.pipeline_mode<synchronous>, transform_indices = @transform_4, window_bounds = array<i64: 32, 32>}, {pipeline_mode = #tpu.pipeline_mode<synchronous>, transform_indices = @transform_5, window_bounds = array<i64: 1, 32>}, {transform_indices = @transform_6, window_bounds = array<i64: 2, 8, 32>}]} {
    %c0 = arith.constant 0 : index
    %c0_0 = arith.constant 0 : index
    %c0_1 = arith.constant 0 : index
    %0 = vector.load %arg1[%c0, %c0_0, %c0_1] : memref<2x8x32xf32, #tpu.memory_space<vmem>>, vector<2x8x32xf32>
    %1 = vector.shape_cast %0 : vector<2x8x32xf32> to vector<16x32xf32>
    %2 = arith.truncf %1 : vector<16x32xf32> to vector<16x32xbf16>
    %c0_2 = arith.constant 0 : index
    %c0_3 = arith.constant 0 : index
    %c0_4 = arith.constant 0 : index
    %3 = vector.load %arg2[%c0_2, %c0_3, %c0_4] : memref<2x16x32xf32, #tpu.memory_space<vmem>>, vector<2x16x32xf32>
    %4 = vector.shape_cast %3 : vector<2x16x32xf32> to vector<32x32xf32>
    %5 = arith.truncf %4 : vector<32x32xf32> to vector<32x32xbf16>
    %c0_5 = arith.constant 0 : index
    %c0_6 = arith.constant 0 : index
    %6 = vector.load %arg3[%c0_5, %c0_6] : memref<32x32xbf16, #tpu.memory_space<vmem>>, vector<32x32xbf16>
    %cst = arith.constant dense<0.000000e+00> : vector<16x32xf32>
    %7 = tpu.matmul %2, %6, %cst {dimension_numbers = #tpu.dot_dimension_numbers<[1], [0], [0], [1], [0, 0, 1, 1], [], []>} : vector<16x32xbf16>, vector<32x32xbf16>, vector<16x32xf32> -> vector<16x32xf32>
    %c0_7 = arith.constant 0 : index
    %c0_8 = arith.constant 0 : index
    %8 = vector.load %arg4[%c0_7, %c0_8] : memref<32x64xbf16, #tpu.memory_space<vmem>>, vector<32x64xbf16>
    %cst_9 = arith.constant dense<0.000000e+00> : vector<32x64xf32>
    %9 = tpu.matmul %5, %8, %cst_9 {dimension_numbers = #tpu.dot_dimension_numbers<[1], [0], [0], [1], [0, 0, 1, 1], [], []>} : vector<32x32xbf16>, vector<32x64xbf16>, vector<32x64xf32> -> vector<32x64xf32>
    %cst_10 = arith.constant 0.353553385 : f32
    %10 = vector.broadcast %cst_10 : f32 to vector<16x32xf32>
    %11 = arith.mulf %7, %10 : vector<16x32xf32>
    %12 = vector.shape_cast %11 : vector<16x32xf32> to vector<2x8x32xf32>
    %13 = vector.extract_strided_slice %9 {offsets = [0, 0], sizes = [32, 32], strides = [1, 1]} : vector<32x64xf32> to vector<32x32xf32>
    %14 = vector.shape_cast %13 : vector<32x32xf32> to vector<2x16x32xf32>
    %15 = vector.extract_strided_slice %9 {offsets = [0, 32], sizes = [32, 32], strides = [1, 1]} : vector<32x64xf32> to vector<32x32xf32>
    %16 = vector.shape_cast %15 : vector<32x32xf32> to vector<2x16x32xf32>
    %cst_11 = arith.constant 0.000000e+00 : f32
    %17 = vector.broadcast %cst_11 : f32 to vector<16x32xf32>
    %18 = vector.extract_strided_slice %12 {offsets = [0, 0, 0], sizes = [2, 8, 8], strides = [1, 1, 1]} : vector<2x8x32xf32> to vector<2x8x8xf32>
    %19 = arith.truncf %18 : vector<2x8x8xf32> to vector<2x8x8xbf16>
    %20 = vector.extract_strided_slice %14 {offsets = [0, 0, 0], sizes = [2, 16, 8], strides = [1, 1, 1]} : vector<2x16x32xf32> to vector<2x16x8xf32>
    %21 = arith.truncf %20 : vector<2x16x8xf32> to vector<2x16x8xbf16>
    %22 = vector.extract_strided_slice %16 {offsets = [0, 0, 0], sizes = [2, 16, 8], strides = [1, 1, 1]} : vector<2x16x32xf32> to vector<2x16x8xf32>
    "tpu.trace_start"() <{level = 10 : i32, message = "bkd,bnd->bkn"}> : () -> ()
    %cst_12 = arith.constant dense<0.000000e+00> : vector<2x8x16xf32>
    %23 = tpu.matmul %19, %21, %cst_12 {dimension_numbers = #tpu.dot_dimension_numbers<[2], [2], [1], [1], [0, 0, 0, 1, 1, 1], [0], [0]>} : vector<2x8x8xbf16>, vector<2x16x8xbf16>, vector<2x8x16xf32> -> vector<2x8x16xf32>
    "tpu.trace_stop"() : () -> ()
    %cst_13 = arith.constant dense<0xFF800000> : vector<2x8xf32>
    %24 = vector.multi_reduction <maximumf>, %23, %cst_13 [2] : vector<2x8x16xf32> to vector<2x8xf32>
    %25 = vector.shape_cast %24 : vector<2x8xf32> to vector<2x8x1xf32>
    %26 = vector.broadcast %25 : vector<2x8x1xf32> to vector<2x8x16xf32>
    %27 = arith.subf %23, %26 : vector<2x8x16xf32>
    %28 = math.exp %27 : vector<2x8x16xf32>
    %cst_14 = arith.constant dense<0.000000e+00> : vector<2x8xf32>
    %29 = vector.multi_reduction <add>, %28, %cst_14 [2] : vector<2x8x16xf32> to vector<2x8xf32>
    %30 = vector.shape_cast %29 : vector<2x8xf32> to vector<2x8x1xf32>
    %31 = tpu.reciprocal %30 {approx = true} : vector<2x8x1xf32> -> vector<2x8x1xf32>
    %32 = vector.broadcast %31 : vector<2x8x1xf32> to vector<2x8x16xf32>
    %33 = arith.mulf %28, %32 : vector<2x8x16xf32>
    %34 = arith.truncf %33 : vector<2x8x16xf32> to vector<2x8x16xbf16>
    %35 = arith.truncf %22 : vector<2x16x8xf32> to vector<2x16x8xbf16>
    "tpu.trace_start"() <{level = 10 : i32, message = "bkn,bnd->bkd"}> : () -> ()
    %cst_15 = arith.constant dense<0.000000e+00> : vector<2x8x8xf32>
    %36 = tpu.matmul %34, %35, %cst_15 {dimension_numbers = #tpu.dot_dimension_numbers<[2], [1], [1], [2], [0, 0, 0, 1, 1, 2], [0], [0]>} : vector<2x8x16xbf16>, vector<2x16x8xbf16>, vector<2x8x8xf32> -> vector<2x8x8xf32>
    "tpu.trace_stop"() : () -> ()
    %37 = vector.shape_cast %36 : vector<2x8x8xf32> to vector<16x8xf32>
    %38 = arith.truncf %37 : vector<16x8xf32> to vector<16x8xbf16>
    %c0_16 = arith.constant 0 : index
    %c0_17 = arith.constant 0 : index
    %39 = vector.load %arg5[%c0_16, %c0_17] : memref<32x32xbf16, #tpu.memory_space<vmem>>, vector<8x32xbf16>
    %cst_18 = arith.constant dense<0.000000e+00> : vector<16x32xf32>
    %40 = tpu.matmul %38, %39, %cst_18 {dimension_numbers = #tpu.dot_dimension_numbers<[1], [0], [0], [1], [0, 0, 1, 1], [], []>} : vector<16x8xbf16>, vector<8x32xbf16>, vector<16x32xf32> -> vector<16x32xf32>
    %41 = arith.addf %17, %40 : vector<16x32xf32>
    %42 = vector.extract_strided_slice %12 {offsets = [0, 0, 8], sizes = [2, 8, 8], strides = [1, 1, 1]} : vector<2x8x32xf32> to vector<2x8x8xf32>
    %43 = arith.truncf %42 : vector<2x8x8xf32> to vector<2x8x8xbf16>
    %44 = vector.extract_strided_slice %14 {offsets = [0, 0, 8], sizes = [2, 16, 8], strides = [1, 1, 1]} : vector<2x16x32xf32> to vector<2x16x8xf32>
    %45 = arith.truncf %44 : vector<2x16x8xf32> to vector<2x16x8xbf16>
    %46 = vector.extract_strided_slice %16 {offsets = [0, 0, 8], sizes = [2, 16, 8], strides = [1, 1, 1]} : vector<2x16x32xf32> to vector<2x16x8xf32>
    "tpu.trace_start"() <{level = 10 : i32, message = "bkd,bnd->bkn"}> : () -> ()
    %cst_19 = arith.constant dense<0.000000e+00> : vector<2x8x16xf32>
    %47 = tpu.matmul %43, %45, %cst_19 {dimension_numbers = #tpu.dot_dimension_numbers<[2], [2], [1], [1], [0, 0, 0, 1, 1, 1], [0], [0]>} : vector<2x8x8xbf16>, vector<2x16x8xbf16>, vector<2x8x16xf32> -> vector<2x8x16xf32>
    "tpu.trace_stop"() : () -> ()
    %cst_20 = arith.constant dense<0xFF800000> : vector<2x8xf32>
    %48 = vector.multi_reduction <maximumf>, %47, %cst_20 [2] : vector<2x8x16xf32> to vector<2x8xf32>
    %49 = vector.shape_cast %48 : vector<2x8xf32> to vector<2x8x1xf32>
    %50 = vector.broadcast %49 : vector<2x8x1xf32> to vector<2x8x16xf32>
    %51 = arith.subf %47, %50 : vector<2x8x16xf32>
    %52 = math.exp %51 : vector<2x8x16xf32>
    %cst_21 = arith.constant dense<0.000000e+00> : vector<2x8xf32>
    %53 = vector.multi_reduction <add>, %52, %cst_21 [2] : vector<2x8x16xf32> to vector<2x8xf32>
    %54 = vector.shape_cast %53 : vector<2x8xf32> to vector<2x8x1xf32>
    %55 = tpu.reciprocal %54 {approx = true} : vector<2x8x1xf32> -> vector<2x8x1xf32>
    %56 = vector.broadcast %55 : vector<2x8x1xf32> to vector<2x8x16xf32>
    %57 = arith.mulf %52, %56 : vector<2x8x16xf32>
    %58 = arith.truncf %57 : vector<2x8x16xf32> to vector<2x8x16xbf16>
    %59 = arith.truncf %46 : vector<2x16x8xf32> to vector<2x16x8xbf16>
    "tpu.trace_start"() <{level = 10 : i32, message = "bkn,bnd->bkd"}> : () -> ()
    %cst_22 = arith.constant dense<0.000000e+00> : vector<2x8x8xf32>
    %60 = tpu.matmul %58, %59, %cst_22 {dimension_numbers = #tpu.dot_dimension_numbers<[2], [1], [1], [2], [0, 0, 0, 1, 1, 2], [0], [0]>} : vector<2x8x16xbf16>, vector<2x16x8xbf16>, vector<2x8x8xf32> -> vector<2x8x8xf32>
    "tpu.trace_stop"() : () -> ()
    %61 = vector.shape_cast %60 : vector<2x8x8xf32> to vector<16x8xf32>
    %62 = arith.truncf %61 : vector<16x8xf32> to vector<16x8xbf16>
    %c8 = arith.constant 8 : index
    %c0_23 = arith.constant 0 : index
    %63 = vector.load %arg5[%c8, %c0_23] : memref<32x32xbf16, #tpu.memory_space<vmem>>, vector<8x32xbf16>
    %cst_24 = arith.constant dense<0.000000e+00> : vector<16x32xf32>
    %64 = tpu.matmul %62, %63, %cst_24 {dimension_numbers = #tpu.dot_dimension_numbers<[1], [0], [0], [1], [0, 0, 1, 1], [], []>} : vector<16x8xbf16>, vector<8x32xbf16>, vector<16x32xf32> -> vector<16x32xf32>
    %65 = arith.addf %41, %64 : vector<16x32xf32>
    %66 = vector.extract_strided_slice %12 {offsets = [0, 0, 16], sizes = [2, 8, 8], strides = [1, 1, 1]} : vector<2x8x32xf32> to vector<2x8x8xf32>
    %67 = arith.truncf %66 : vector<2x8x8xf32> to vector<2x8x8xbf16>
    %68 = vector.extract_strided_slice %14 {offsets = [0, 0, 16], sizes = [2, 16, 8], strides = [1, 1, 1]} : vector<2x16x32xf32> to vector<2x16x8xf32>
    %69 = arith.truncf %68 : vector<2x16x8xf32> to vector<2x16x8xbf16>
    %70 = vector.extract_strided_slice %16 {offsets = [0, 0, 16], sizes = [2, 16, 8], strides = [1, 1, 1]} : vector<2x16x32xf32> to vector<2x16x8xf32>
    "tpu.trace_start"() <{level = 10 : i32, message = "bkd,bnd->bkn"}> : () -> ()
    %cst_25 = arith.constant dense<0.000000e+00> : vector<2x8x16xf32>
    %71 = tpu.matmul %67, %69, %cst_25 {dimension_numbers = #tpu.dot_dimension_numbers<[2], [2], [1], [1], [0, 0, 0, 1, 1, 1], [0], [0]>} : vector<2x8x8xbf16>, vector<2x16x8xbf16>, vector<2x8x16xf32> -> vector<2x8x16xf32>
    "tpu.trace_stop"() : () -> ()
    %cst_26 = arith.constant dense<0xFF800000> : vector<2x8xf32>
    %72 = vector.multi_reduction <maximumf>, %71, %cst_26 [2] : vector<2x8x16xf32> to vector<2x8xf32>
    %73 = vector.shape_cast %72 : vector<2x8xf32> to vector<2x8x1xf32>
    %74 = vector.broadcast %73 : vector<2x8x1xf32> to vector<2x8x16xf32>
    %75 = arith.subf %71, %74 : vector<2x8x16xf32>
    %76 = math.exp %75 : vector<2x8x16xf32>
    %cst_27 = arith.constant dense<0.000000e+00> : vector<2x8xf32>
    %77 = vector.multi_reduction <add>, %76, %cst_27 [2] : vector<2x8x16xf32> to vector<2x8xf32>
    %78 = vector.shape_cast %77 : vector<2x8xf32> to vector<2x8x1xf32>
    %79 = tpu.reciprocal %78 {approx = true} : vector<2x8x1xf32> -> vector<2x8x1xf32>
    %80 = vector.broadcast %79 : vector<2x8x1xf32> to vector<2x8x16xf32>
    %81 = arith.mulf %76, %80 : vector<2x8x16xf32>
    %82 = arith.truncf %81 : vector<2x8x16xf32> to vector<2x8x16xbf16>
    %83 = arith.truncf %70 : vector<2x16x8xf32> to vector<2x16x8xbf16>
    "tpu.trace_start"() <{level = 10 : i32, message = "bkn,bnd->bkd"}> : () -> ()
    %cst_28 = arith.constant dense<0.000000e+00> : vector<2x8x8xf32>
    %84 = tpu.matmul %82, %83, %cst_28 {dimension_numbers = #tpu.dot_dimension_numbers<[2], [1], [1], [2], [0, 0, 0, 1, 1, 2], [0], [0]>} : vector<2x8x16xbf16>, vector<2x16x8xbf16>, vector<2x8x8xf32> -> vector<2x8x8xf32>
    "tpu.trace_stop"() : () -> ()
    %85 = vector.shape_cast %84 : vector<2x8x8xf32> to vector<16x8xf32>
    %86 = arith.truncf %85 : vector<16x8xf32> to vector<16x8xbf16>
    %c16 = arith.constant 16 : index
    %c0_29 = arith.constant 0 : index
    %87 = vector.load %arg5[%c16, %c0_29] : memref<32x32xbf16, #tpu.memory_space<vmem>>, vector<8x32xbf16>
    %cst_30 = arith.constant dense<0.000000e+00> : vector<16x32xf32>
    %88 = tpu.matmul %86, %87, %cst_30 {dimension_numbers = #tpu.dot_dimension_numbers<[1], [0], [0], [1], [0, 0, 1, 1], [], []>} : vector<16x8xbf16>, vector<8x32xbf16>, vector<16x32xf32> -> vector<16x32xf32>
    %89 = arith.addf %65, %88 : vector<16x32xf32>
    %90 = vector.extract_strided_slice %12 {offsets = [0, 0, 24], sizes = [2, 8, 8], strides = [1, 1, 1]} : vector<2x8x32xf32> to vector<2x8x8xf32>
    %91 = arith.truncf %90 : vector<2x8x8xf32> to vector<2x8x8xbf16>
    %92 = vector.extract_strided_slice %14 {offsets = [0, 0, 24], sizes = [2, 16, 8], strides = [1, 1, 1]} : vector<2x16x32xf32> to vector<2x16x8xf32>
    %93 = arith.truncf %92 : vector<2x16x8xf32> to vector<2x16x8xbf16>
    %94 = vector.extract_strided_slice %16 {offsets = [0, 0, 24], sizes = [2, 16, 8], strides = [1, 1, 1]} : vector<2x16x32xf32> to vector<2x16x8xf32>
    "tpu.trace_start"() <{level = 10 : i32, message = "bkd,bnd->bkn"}> : () -> ()
    %cst_31 = arith.constant dense<0.000000e+00> : vector<2x8x16xf32>
    %95 = tpu.matmul %91, %93, %cst_31 {dimension_numbers = #tpu.dot_dimension_numbers<[2], [2], [1], [1], [0, 0, 0, 1, 1, 1], [0], [0]>} : vector<2x8x8xbf16>, vector<2x16x8xbf16>, vector<2x8x16xf32> -> vector<2x8x16xf32>
    "tpu.trace_stop"() : () -> ()
    %cst_32 = arith.constant dense<0xFF800000> : vector<2x8xf32>
    %96 = vector.multi_reduction <maximumf>, %95, %cst_32 [2] : vector<2x8x16xf32> to vector<2x8xf32>
    %97 = vector.shape_cast %96 : vector<2x8xf32> to vector<2x8x1xf32>
    %98 = vector.broadcast %97 : vector<2x8x1xf32> to vector<2x8x16xf32>
    %99 = arith.subf %95, %98 : vector<2x8x16xf32>
    %100 = math.exp %99 : vector<2x8x16xf32>
    %cst_33 = arith.constant dense<0.000000e+00> : vector<2x8xf32>
    %101 = vector.multi_reduction <add>, %100, %cst_33 [2] : vector<2x8x16xf32> to vector<2x8xf32>
    %102 = vector.shape_cast %101 : vector<2x8xf32> to vector<2x8x1xf32>
    %103 = tpu.reciprocal %102 {approx = true} : vector<2x8x1xf32> -> vector<2x8x1xf32>
    %104 = vector.broadcast %103 : vector<2x8x1xf32> to vector<2x8x16xf32>
    %105 = arith.mulf %100, %104 : vector<2x8x16xf32>
    %106 = arith.truncf %105 : vector<2x8x16xf32> to vector<2x8x16xbf16>
    %107 = arith.truncf %94 : vector<2x16x8xf32> to vector<2x16x8xbf16>
    "tpu.trace_start"() <{level = 10 : i32, message = "bkn,bnd->bkd"}> : () -> ()
    %cst_34 = arith.constant dense<0.000000e+00> : vector<2x8x8xf32>
    %108 = tpu.matmul %106, %107, %cst_34 {dimension_numbers = #tpu.dot_dimension_numbers<[2], [1], [1], [2], [0, 0, 0, 1, 1, 2], [0], [0]>} : vector<2x8x16xbf16>, vector<2x16x8xbf16>, vector<2x8x8xf32> -> vector<2x8x8xf32>
    "tpu.trace_stop"() : () -> ()
    %109 = vector.shape_cast %108 : vector<2x8x8xf32> to vector<16x8xf32>
    %110 = arith.truncf %109 : vector<16x8xf32> to vector<16x8xbf16>
    %c24 = arith.constant 24 : index
    %c0_35 = arith.constant 0 : index
    %111 = vector.load %arg5[%c24, %c0_35] : memref<32x32xbf16, #tpu.memory_space<vmem>>, vector<8x32xbf16>
    %cst_36 = arith.constant dense<0.000000e+00> : vector<16x32xf32>
    %112 = tpu.matmul %110, %111, %cst_36 {dimension_numbers = #tpu.dot_dimension_numbers<[1], [0], [0], [1], [0, 0, 1, 1], [], []>} : vector<16x8xbf16>, vector<8x32xbf16>, vector<16x32xf32> -> vector<16x32xf32>
    %113 = arith.addf %89, %112 : vector<16x32xf32>
    %c0_37 = arith.constant 0 : index
    %c0_38 = arith.constant 0 : index
    %114 = vector.load %arg6[%c0_37, %c0_38] : memref<1x32xf32, #tpu.memory_space<vmem>>, vector<1x32xf32>
    %115 = vector.broadcast %114 : vector<1x32xf32> to vector<16x32xf32>
    %116 = arith.addf %113, %115 : vector<16x32xf32>
    %117 = vector.shape_cast %116 : vector<16x32xf32> to vector<2x8x32xf32>
    %c0_39 = arith.constant 0 : index
    %c0_40 = arith.constant 0 : index
    %c0_41 = arith.constant 0 : index
    %118 = vector.load %arg7[%c0_39, %c0_40, %c0_41] : memref<2x8x32xf32, #tpu.memory_space<vmem>>, vector<2x8x32xf32>
    tpu.vector_store %arg7[%c0_39, %c0_40, %c0_41], %117 {strides = array<i32>} : memref<2x8x32xf32, #tpu.memory_space<vmem>>, vector<2x8x32xf32>,
    return
  }
  func.func @transform_0(%arg0: i32) -> (i32, i32, i32) {
    %c0_i32 = arith.constant 0 : i32
    %c0_i32_0 = arith.constant 0 : i32
    %c0_i32_1 = arith.constant 0 : i32
    return %arg0, %c0_i32, %c0_i32_0 : i32, i32, i32
  }
  func.func @transform_1(%arg0: i32) -> (i32, i32, i32) {
    %c0_i32 = arith.constant 0 : i32
    %c0_i32_0 = arith.constant 0 : i32
    %c0_i32_1 = arith.constant 0 : i32
    return %arg0, %c0_i32, %c0_i32_0 : i32, i32, i32
  }
  func.func @transform_2(%arg0: i32) -> (i32, i32) {
    %c0_i32 = arith.constant 0 : i32
    %c0_i32_0 = arith.constant 0 : i32
    %c0_i32_1 = arith.constant 0 : i32
    return %c0_i32, %c0_i32_0 : i32, i32
  }
  func.func @transform_3(%arg0: i32) -> (i32, i32) {
    %c0_i32 = arith.constant 0 : i32
    %c0_i32_0 = arith.constant 0 : i32
    %c0_i32_1 = arith.constant 0 : i32
    return %c0_i32, %c0_i32_0 : i32, i32
  }
  func.func @transform_4(%arg0: i32) -> (i32, i32) {
    %c0_i32 = arith.constant 0 : i32
    %c0_i32_0 = arith.constant 0 : i32
    %c0_i32_1 = arith.constant 0 : i32
    return %c0_i32, %c0_i32_0 : i32, i32
  }
  func.func @transform_5(%arg0: i32) -> (i32, i32) {
    %c0_i32 = arith.constant 0 : i32
    %c0_i32_0 = arith.constant 0 : i32
    %c0_i32_1 = arith.constant 0 : i32
    return %c0_i32, %c0_i32_0 : i32, i32
  }
  func.func @transform_6(%arg0: i32) -> (i32, i32, i32) {
    %c0_i32 = arith.constant 0 : i32
    %c0_i32_0 = arith.constant 0 : i32
    %c0_i32_1 = arith.constant 0 : i32
    return %arg0, %c0_i32, %c0_i32_0 : i32, i32, i32
  }
}

</mosaic_0001>

<llo_original>
// kernel: tpu_custom_call.1
$region0: #{tpu_custom_call.1}
  #allocation0 [shape = 'u32[]', space=smem, size = 0x4, offset = 0x4, fixed_abs, tag = 'smem constant byte address 0x4 - core index']
  #allocation1 [shape = 'u32[144,128]{1,0:T(1,128)}', space=vmem, size = 0x12000, scoped, tag = 'internal scratch']
  %s0 = inlined_call_operand.hbm [shape: f32[4,8,32], index: 0, kind: input, shape index: {}]
  %s1 = inlined_call_operand.hbm [shape: f32[4,16,32], index: 1, kind: input, shape index: {}]
  %s2 = inlined_call_operand.hbm [shape: bf16[32,32], index: 2, kind: input, shape index: {}]
  %s3 = inlined_call_operand.hbm [shape: bf16[32,64], index: 3, kind: input, shape index: {}]
  %s4 = inlined_call_operand.hbm [shape: bf16[32,32], index: 4, kind: input, shape index: {}]
  %s5 = inlined_call_operand.vmem [shape: f32[1,32], index: 5, kind: input, shape index: {}]
  %s6 = inlined_call_operand.hbm [shape: f32[4,8,32], index: 6, kind: output, shape index: {}]
  %s7 = sld [smem:[#allocation0]]
  $region77: #{tpu_custom_call.1} parent=0
    _
  %s9 = ssub.s32 1, %s7
  %s10 = scalar_select 0, %s9, %s7
  $region1: #{tpu_custom_call.1} parent=0
    #allocation2 [shape = 'u8[16384]{0}', space=vmem, size = 0x4000, scoped, tag = 'input window, operand 0']
    #allocation3 [shape = 's32[2]{0}', space=sflag, size = 0x8, scoped, tag = 'scoped memory for tpu_custom_call.1']
    #allocation4 [shape = 's32[2]{0}', space=sflag, size = 0x8, scoped, tag = 'scoped memory for tpu_custom_call.1']
    #allocation5 [shape = 'u8[32768]{0}', space=vmem, size = 0x8000, scoped, tag = 'input window, operand 1']
    #allocation6 [shape = 's32[2]{0}', space=sflag, size = 0x8, scoped, tag = 'scoped memory for tpu_custom_call.1']
    #allocation7 [shape = 'u8[8192]{0}', space=vmem, size = 0x2000, scoped, tag = 'input window, operand 2, single buffered']
    #allocation8 [shape = 'u8[8192]{0}', space=vmem, size = 0x2000, scoped, tag = 'input window, operand 3, single buffered']
    #allocation9 [shape = 's32[1]{0}', space=sflag, size = 0x4, scoped, tag = 'scoped memory for tpu_custom_call.1']
    #allocation10 [shape = 'u8[8192]{0}', space=vmem, size = 0x2000, scoped, tag = 'input window, operand 4, single buffered']
    #allocation11 [shape = 'u8[16384]{0}', space=vmem, size = 0x4000, scoped, tag = 'output window, operand 0']
    %11 = vsyncpa [#allocation3], 0
    %s12 = scalar_lea.sflag [#allocation3], 1
    %13 = vsyncpa %s12, 0
    %14 = vsyncpa [#allocation6], 0
    %s15 = scalar_lea.sflag [#allocation6], 1
    %16 = vsyncpa %s15, 0
    %17 = vsyncpa [#allocation9], 0
    %18 = vsyncpa [#allocation4], 0
    %s19 = scalar_lea.sflag [#allocation4], 1
    %20 = vsyncpa %s19, 0
    loop: start=0, step=1, limit=4
    $region2: #{tpu_custom_call.1} parent=1 // loop_pre_header
      _
    $region3: #{tpu_custom_call.1} parent=1 // loop_header
      %s22 = sphi 0, %s26
      %p23 = scmp.ge.s32.totalorder %s22, 4
      %s32 = sphi 0, %s34
      %s35 = sphi 0, %s32
      %s36 = sphi 0, %s35
      %s52 = sphi 0, %s36
      %s58 = sphi 0, %s60
      %s61 = sphi 0, %s58
      %s62 = sphi 0, %s61
      %s78 = sphi 0, %s62
      %s82 = sphi 0, %s82
      %s84 = sphi 0, %s82
      %s85 = sphi 0, %s84
      %s99 = sphi 0, %s85
      %s103 = sphi 0, %s103
      %s105 = sphi 0, %s103
      %s106 = sphi 0, %s105
      %s120 = sphi 0, %s106
      %s124 = sphi 0, %s124
      %s126 = sphi 0, %s124
      %s127 = sphi 0, %s126
      %s141 = sphi 0, %s127
      %s145 = sphi 0, %s145
      %s147 = sphi 0, %s145
      %s148 = sphi 0, %s147
      %s162 = sphi 0, %s148
      %s168 = sphi 0, %s170
      %s171 = sphi 0, %s168
      %s172 = sphi 0, %s171
      %s188 = sphi 0, %s172
    $region4: #{tpu_custom_call.1} parent=1 // loop_header_branch
      %25 = sbr.rel (%p23) target = $region8
    $region5: #{tpu_custom_call.1} parent=1 // loop_body
      %s27 = ssub.s32 %s22, 1
      %s28 = ssub.s32 %s22, 2
      %s29 = sadd.s32 %s22, 1
      %s30 = ssub.s32 %s22, %s29
      %p31 = scmp.eq.s32.totalorder %s30, 0
      %s33 = sadd.s32 %s32, 1
      %s34 = scalar_select %p31, %s32, %s33
      %p37 = pneg %p31
      %p38 = scmp.eq.s32.totalorder %s22, 1
      %p39 = por %p37, %p38
      %p40 = scmp.ne.s32.totalorder %s32, %s35
      %p41 = scmp.eq.s32.totalorder %s22, 0
      %p42 = por %p40, %p41
      %p43 = scmp.ne.s32.totalorder %s32, %s35
      %p44 = scmp.eq.s32.totalorder %s27, 1
      %p45 = por %p43, %p44
      %p46 = scmp.ne.s32.totalorder %s35, %s36
      %p47 = scmp.eq.s32.totalorder %s27, 0
      %p48 = por %p46, %p47
      %p49 = scmp.ne.s32.totalorder %s35, %s36
      %p50 = scmp.eq.s32.totalorder %s28, 1
      %p51 = por %p49, %p50
      %p53 = scmp.ne.s32.totalorder %s36, %s52
      %p54 = scmp.eq.s32.totalorder %s28, 0
      %p55 = por %p53, %p54
      %s56 = ssub.s32 %s22, %s29
      %p57 = scmp.eq.s32.totalorder %s56, 0
      %s59 = sadd.s32 %s58, 1
      %s60 = scalar_select %p57, %s58, %s59
      %p63 = pneg %p57
      %p64 = scmp.eq.s32.totalorder %s22, 1
      %p65 = por %p63, %p64
      %p66 = scmp.ne.s32.totalorder %s58, %s61
      %p67 = scmp.eq.s32.totalorder %s22, 0
      %p68 = por %p66, %p67
      %p69 = scmp.ne.s32.totalorder %s58, %s61
      %p70 = scmp.eq.s32.totalorder %s27, 1
      %p71 = por %p69, %p70
      %p72 = scmp.ne.s32.totalorder %s61, %s62
      %p73 = scmp.eq.s32.totalorder %s27, 0
      %p74 = por %p72, %p73
      %p75 = scmp.ne.s32.totalorder %s61, %s62
      %p76 = scmp.eq.s32.totalorder %s28, 1
      %p77 = por %p75, %p76
      %p79 = scmp.ne.s32.totalorder %s62, %s78
      %p80 = scmp.eq.s32.totalorder %s28, 0
      %p81 = por %p79, %p80
      %s83 = sadd.s32 %s82, 1
      %p86 = scmp.eq.s32.totalorder %s22, 1
      %p87 = scmp.ne.s32.totalorder %s82, %s84
      %p88 = scmp.eq.s32.totalorder %s22, 0
      %p89 = por %p87, %p88
      %p90 = scmp.ne.s32.totalorder %s82, %s84
      %p91 = scmp.eq.s32.totalorder %s27, 1
      %p92 = por %p90, %p91
      %p93 = scmp.ne.s32.totalorder %s84, %s85
      %p94 = scmp.eq.s32.totalorder %s27, 0
      %p95 = por %p93, %p94
      %p96 = scmp.ne.s32.totalorder %s84, %s85
      %p97 = scmp.eq.s32.totalorder %s28, 1
      %p98 = por %p96, %p97
      %p100 = scmp.ne.s32.totalorder %s85, %s99
      %p101 = scmp.eq.s32.totalorder %s28, 0
      %p102 = por %p100, %p101
      %s104 = sadd.s32 %s103, 1
      %p107 = scmp.eq.s32.totalorder %s22, 1
      %p108 = scmp.ne.s32.totalorder %s103, %s105
      %p109 = scmp.eq.s32.totalorder %s22, 0
      %p110 = por %p108, %p109
      %p111 = scmp.ne.s32.totalorder %s103, %s105
      %p112 = scmp.eq.s32.totalorder %s27, 1
      %p113 = por %p111, %p112
      %p114 = scmp.ne.s32.totalorder %s105, %s106
      %p115 = scmp.eq.s32.totalorder %s27, 0
      %p116 = por %p114, %p115
      %p117 = scmp.ne.s32.totalorder %s105, %s106
      %p118 = scmp.eq.s32.totalorder %s28, 1
      %p119 = por %p117, %p118
      %p121 = scmp.ne.s32.totalorder %s106, %s120
      %p122 = scmp.eq.s32.totalorder %s28, 0
      %p123 = por %p121, %p122
      %s125 = sadd.s32 %s124, 1
      %p128 = scmp.eq.s32.totalorder %s22, 1
      %p129 = scmp.ne.s32.totalorder %s124, %s126
      %p130 = scmp.eq.s32.totalorder %s22, 0
      %p131 = por %p129, %p130
      %p132 = scmp.ne.s32.totalorder %s124, %s126
      %p133 = scmp.eq.s32.totalorder %s27, 1
      %p134 = por %p132, %p133
      %p135 = scmp.ne.s32.totalorder %s126, %s127
      %p136 = scmp.eq.s32.totalorder %s27, 0
      %p137 = por %p135, %p136
      %p138 = scmp.ne.s32.totalorder %s126, %s127
      %p139 = scmp.eq.s32.totalorder %s28, 1
      %p140 = por %p138, %p139
      %p142 = scmp.ne.s32.totalorder %s127, %s141
      %p143 = scmp.eq.s32.totalorder %s28, 0
      %p144 = por %p142, %p143
      %s146 = sadd.s32 %s145, 1
      %p149 = scmp.eq.s32.totalorder %s22, 1
      %p150 = scmp.ne.s32.totalorder %s145, %s147
      %p151 = scmp.eq.s32.totalorder %s22, 0
      %p152 = por %p150, %p151
      %p153 = scmp.ne.s32.totalorder %s145, %s147
      %p154 = scmp.eq.s32.totalorder %s27, 1
      %p155 = por %p153, %p154
      %p156 = scmp.ne.s32.totalorder %s147, %s148
      %p157 = scmp.eq.s32.totalorder %s27, 0
      %p158 = por %p156, %p157
      %p159 = scmp.ne.s32.totalorder %s147, %s148
      %p160 = scmp.eq.s32.totalorder %s28, 1
      %p161 = por %p159, %p160
      %p163 = scmp.ne.s32.totalorder %s148, %s162
      %p164 = scmp.eq.s32.totalorder %s28, 0
      %p165 = por %p163, %p164
      %s166 = ssub.s32 %s22, %s29
      %p167 = scmp.eq.s32.totalorder %s166, 0
      %s169 = sadd.s32 %s168, 1
      %s170 = scalar_select %p167, %s168, %s169
      %p173 = pneg %p167
      %p174 = scmp.eq.s32.totalorder %s22, 1
      %p175 = por %p173, %p174
      %p176 = scmp.ne.s32.totalorder %s168, %s171
      %p177 = scmp.eq.s32.totalorder %s22, 0
      %p178 = por %p176, %p177
      %p179 = scmp.ne.s32.totalorder %s168, %s171
      %p180 = scmp.eq.s32.totalorder %s27, 1
      %p181 = por %p179, %p180
      %p182 = scmp.ne.s32.totalorder %s171, %s172
      %p183 = scmp.eq.s32.totalorder %s27, 0
      %p184 = por %p182, %p183
      %p185 = scmp.ne.s32.totalorder %s171, %s172
      %p186 = scmp.eq.s32.totalorder %s28, 1
      %p187 = por %p185, %p186
      %p189 = scmp.ne.s32.totalorder %s172, %s188
      %p190 = scmp.eq.s32.totalorder %s28, 0
      %p191 = por %p189, %p190
      %p192 = scmp.le.s32.totalorder 1, %s22
      %p193 = scmp.lt.s32.totalorder %s22, 3
      %p194 = pnand %p192, %p193
      %p195 = pneg %p194
      // Predicated region
      $region9: #{tpu_custom_call.1} parent=5 // pred_check
        _
      $region10: #{tpu_custom_call.1} parent=5 // pred_check_branch
        %197 = sbr.rel (%p194) target = $region12
      $region11: #{tpu_custom_call.1} parent=5 // pred_region
        %s198 = ssub.s32 %s22, 1
        // Predicated region
        $region13: #{tpu_custom_call.1} parent=11 // pred_check
          %p199 = pneg %p95
        $region14: #{tpu_custom_call.1} parent=11 // pred_check_branch
          %201 = sbr.rel (%p199) target = $region16
        $region15: #{tpu_custom_call.1} parent=11 // pred_region
          %s203 = ssub.s32 256, 256
          %204 = vsyncadd [#allocation6], %s203
          %s205 = sshll.u32 [#allocation7], 4
          %s206 = int_to_ptr.vmem [resolvable:$true] %s205
          %211 = dma.hbm_to_vmem [thread:$0]  %s2, 256, %s206, [#allocation6], 64, 64, 4
        $region16: #{tpu_custom_call.1} parent=11 // pred_fallthru
          _
        // Predicated region
        $region17: #{tpu_custom_call.1} parent=11 // pred_check
          %p212 = pneg %p116
        $region18: #{tpu_custom_call.1} parent=11 // pred_check_branch
          %214 = sbr.rel (%p212) target = $region20
        $region19: #{tpu_custom_call.1} parent=11 // pred_region
          %s216 = ssub.s32 256, 256
          %217 = vsyncadd [#allocation9], %s216
          %s218 = sshll.u32 [#allocation8], 4
          %s219 = int_to_ptr.vmem [resolvable:$true] %s218
          %224 = dma.hbm_to_vmem [thread:$0]  %s3, 256, %s219, [#allocation9], 64, 64, 4
        $region20: #{tpu_custom_call.1} parent=11 // pred_fallthru
          _
        // Predicated region
        $region21: #{tpu_custom_call.1} parent=11 // pred_check
          %p225 = pneg %p137
        $region22: #{tpu_custom_call.1} parent=11 // pred_check_branch
          %227 = sbr.rel (%p225) target = $region24
        $region23: #{tpu_custom_call.1} parent=11 // pred_region
          %s229 = ssub.s32 256, 256
          %230 = vsyncadd [#allocation9], %s229
          %s231 = sshll.u32 [#allocation10], 4
          %s232 = int_to_ptr.vmem [resolvable:$true] %s231
          %237 = dma.hbm_to_vmem [thread:$0]  %s4, 256, %s232, [#allocation9], 64, 64, 4
        $region24: #{tpu_custom_call.1} parent=11 // pred_fallthru
          _
        // Predicated region
        $region25: #{tpu_custom_call.1} parent=11 // pred_check
          %p238 = pneg %p158
        $region26: #{tpu_custom_call.1} parent=11 // pred_check_branch
          %240 = sbr.rel (%p238) target = $region28
        $region27: #{tpu_custom_call.1} parent=11 // pred_region
          _
        $region28: #{tpu_custom_call.1} parent=11 // pred_fallthru
          _
      $region12: #{tpu_custom_call.1} parent=5 // pred_fallthru
        _
      %p241 = scmp.lt.s32.totalorder %s22, 2
      // Predicated region
      $region29: #{tpu_custom_call.1} parent=5 // pred_check
        %p242 = pneg %p241
      $region30: #{tpu_custom_call.1} parent=5 // pred_check_branch
        %244 = sbr.rel (%p242) target = $region32
      $region31: #{tpu_custom_call.1} parent=5 // pred_region
        // Predicated region
        $region33: #{tpu_custom_call.1} parent=31 // pred_check
          %p245 = pneg %p42
        $region34: #{tpu_custom_call.1} parent=31 // pred_check_branch
          %247 = sbr.rel (%p245) target = $region36
        $region35: #{tpu_custom_call.1} parent=31 // pred_region
          %s248 = sand.u32 %s32, 1
          %s249 = scalar_lea.sflag [#allocation3], %s248
          %s250 = sand.u32 %s32, 1
          %s251 = smul.addr %s250, 16
          %s252 = scalar_lea.vmem [#allocation2], %s251
          %s253 = smul.u32 2, %s22
          %s255 = ssub.s32 256, 256
          %256 = vsyncadd %s249, %s255
          %s257 = smul.addr %s253, 128
          %s258 = scalar_lea.hbm %s0, %s257
          %s259 = sshll.u32 %s252, 4
          %s260 = int_to_ptr.vmem [resolvable:$true] %s259
          %265 = dma.hbm_to_vmem [thread:$0]  %s258, 256, %s260, %s249, 128, 128, 8
        $region36: #{tpu_custom_call.1} parent=31 // pred_fallthru
          _
        // Predicated region
        $region37: #{tpu_custom_call.1} parent=31 // pred_check
          %p266 = pneg %p68
        $region38: #{tpu_custom_call.1} parent=31 // pred_check_branch
          %268 = sbr.rel (%p266) target = $region40
        $region39: #{tpu_custom_call.1} parent=31 // pred_region
          %s269 = sand.u32 %s22, 1
          %s270 = scalar_lea.sflag [#allocation6], %s269
          %s271 = sand.u32 %s58, 1
          %s272 = smul.addr %s271, 32
          %s273 = scalar_lea.vmem [#allocation5], %s272
          %s274 = smul.u32 2, %s22
          %s276 = ssub.s32 512, 512
          %277 = vsyncadd %s270, %s276
          %s278 = smul.addr %s274, 2
          %s279 = smul.addr %s278, 128
          %s280 = scalar_lea.hbm %s1, %s279
          %s281 = sshll.u32 %s273, 4
          %s282 = int_to_ptr.vmem [resolvable:$true] %s281
          %287 = dma.hbm_to_vmem [thread:$0]  %s280, 512, %s282, %s270, 128, 128, 8
        $region40: #{tpu_custom_call.1} parent=31 // pred_fallthru
          _
      $region32: #{tpu_custom_call.1} parent=5 // pred_fallthru
        _
      %p288 = scmp.le.s32.totalorder 1, %s22
      %p289 = scmp.lt.s32.totalorder %s22, 3
      %p290 = pnand %p288, %p289
      %p291 = pneg %p290
      // Predicated region
      $region41: #{tpu_custom_call.1} parent=5 // pred_check
        _
      $region42: #{tpu_custom_call.1} parent=5 // pred_check_branch
        %293 = sbr.rel (%p290) target = $region44
      $region43: #{tpu_custom_call.1} parent=5 // pred_region
        %s294 = ssub.s32 %s22, 1
        %s295 = sand.u32 %s35, 1
        %s296 = scalar_lea.sflag [#allocation3], %s295
        %s297 = sand.u32 %s35, 1
        %s298 = smul.addr %s297, 16
        %s299 = scalar_lea.vmem [#allocation2], %s298
        // Predicated region
        $region45: #{tpu_custom_call.1} parent=43 // pred_check
          %p300 = pneg %p48
        $region46: #{tpu_custom_call.1} parent=43 // pred_check_branch
          %302 = sbr.rel (%p300) target = $region48
        $region47: #{tpu_custom_call.1} parent=43 // pred_region
          %303 = dma.done %s296, 256
        $region48: #{tpu_custom_call.1} parent=43 // pred_fallthru
          _
        %s304 = sand.u32 %s27, 1
        %s305 = scalar_lea.sflag [#allocation6], %s304
        %s306 = sand.u32 %s61, 1
        %s307 = smul.addr %s306, 32
        %s308 = scalar_lea.vmem [#allocation5], %s307
        // Predicated region
        $region49: #{tpu_custom_call.1} parent=43 // pred_check
          %p309 = pneg %p74
        $region50: #{tpu_custom_call.1} parent=43 // pred_check_branch
          %311 = sbr.rel (%p309) target = $region52
        $region51: #{tpu_custom_call.1} parent=43 // pred_region
          %312 = dma.done %s305, 512
        $region52: #{tpu_custom_call.1} parent=43 // pred_fallthru
          _
        // Predicated region
        $region53: #{tpu_custom_call.1} parent=43 // pred_check
          %p313 = pneg %p95
        $region54: #{tpu_custom_call.1} parent=43 // pred_check_branch
          %315 = sbr.rel (%p313) target = $region56
        $region55: #{tpu_custom_call.1} parent=43 // pred_region
          %316 = dma.done [#allocation6], 256
        $region56: #{tpu_custom_call.1} parent=43 // pred_fallthru
          _
        // Predicated region
        $region57: #{tpu_custom_call.1} parent=43 // pred_check
          %p317 = pneg %p116
        $region58: #{tpu_custom_call.1} parent=43 // pred_check_branch
          %319 = sbr.rel (%p317) target = $region60
        $region59: #{tpu_custom_call.1} parent=43 // pred_region
          %320 = dma.done [#allocation9], 256
        $region60: #{tpu_custom_call.1} parent=43 // pred_fallthru
          _
        // Predicated region
        $region61: #{tpu_custom_call.1} parent=43 // pred_check
          %p321 = pneg %p137
        $region62: #{tpu_custom_call.1} parent=43 // pred_check_branch
          %323 = sbr.rel (%p321) target = $region64
        $region63: #{tpu_custom_call.1} parent=43 // pred_region
          %324 = dma.done [#allocation9], 256
        $region64: #{tpu_custom_call.1} parent=43 // pred_fallthru
          _
        %s325 = sand.u32 %s35, 1
        %s326 = scalar_lea.sflag [#allocation3], %s325
        %s327 = sand.u32 %s35, 1
        %s328 = smul.addr %s327, 16
        %s329 = scalar_lea.vmem [#allocation2], %s328
        %p330 = pneg %p48
        %p331 = pneg %p45
        %s332 = sand.u32 %s27, 1
        %s333 = scalar_lea.sflag [#allocation6], %s332
        %s334 = sand.u32 %s61, 1
        %s335 = smul.addr %s334, 32
        %s336 = scalar_lea.vmem [#allocation5], %s335
        %p337 = pneg %p74
        %p338 = pneg %p71
        %p339 = pneg %p95
        %p340 = pneg %p92
        %p341 = pneg %p116
        %p342 = pneg %p113
        %p343 = pneg %p137
        %p344 = pneg %p134
        %p345 = pneg %p158
        %p346 = pneg %p155
        %p347 = pneg %p184
        %p348 = pneg %p181
        %s349 = sand.u32 %s171, 1
        %s350 = scalar_lea.sflag [#allocation4], %s349
        %s351 = sand.u32 %s171, 1
        %s352 = smul.addr %s351, 16
        %s353 = scalar_lea.vmem [#allocation11], %s352
        %s354 = smul.u32 2, %s27
        %s355 = smul.u32 2, %s27
        %s356 = smul.u32 2, %s27
        %v358 = vld [vmem:[%s299] sm:$0xff]
        %v359 = vld [vmem:[%s299 + $0x8] sm:$0xff]
        %v360 = vpack.c.bf16 %v359, %v358
        %v361 = vld [vmem:[%s308] sm:$0xff]
        %v362 = vld [vmem:[%s308 + $0x8] sm:$0xff]
        %v363 = vld [vmem:[%s308 + $0x10] sm:$0xff]
        %v364 = vld [vmem:[%s308 + $0x18] sm:$0xff]
        %v365 = vpack.c.bf16 %v362, %v361
        %v366 = vpack.c.bf16 %v364, %v363
        %v367 = vld [vmem:[#allocation7] sm:$0xf]
        %v368 = vld [vmem:[#allocation7 + $0x4] sm:$0xf]
        %v369 = vld [vmem:[#allocation7 + $0x8] sm:$0xf]
        %v370 = vld [vmem:[#allocation7 + $0xc] sm:$0xf]
        %v375 = vunpack.c.l.b16 %v367
        %v376 = vunpack.c.l.b16 %v368
        %v377 = vunpack.c.l.b16 %v369
        %v378 = vunpack.c.l.b16 %v370
        %v379 = vpack.c.b16 %v376, %v375
        %v380 = vpack.c.b16 %v378, %v377
        %vm383 = vcmask 261120
        %v385 = vsel %vm383, %v360, 0
        %387 = vmatprep.subr.bf16.mxu0 0
        %388 = vmatpush1.bf16.msra.mxu0 %v379
        %389 = vmatprep.subr.bf16.mxu0 0
        %390 = vmatpush1.bf16.msra.mxu0 %v380
        %391 = vmatprep.subr.bf16.mxu0 0
        %392 = vmatpush1.bf16.msra.mxu0 0
        %393 = vmatprep.subr.bf16.mxu0 0
        %394 = vmatpush1.bf16.msra.mxu0 0
        %395 = vmatprep.subr.bf16.mxu0 0
        %396 = vmatpush1.bf16.msra.mxu0 0
        %397 = vmatprep.subr.bf16.mxu0 0
        %398 = vmatpush1.bf16.msra.mxu0 0
        %399 = vmatprep.subr.bf16.mxu0 0
        %400 = vmatpush1.bf16.msra.mxu0 0
        %401 = vmatprep.subr.bf16.mxu0 0
        %402 = vmatpush1.bf16.msra.mxu0 0
        %403 = vmatprep.subr.bf16.mxu0 0
        %404 = vmatpush1.bf16.msra.mxu0 0
        %405 = vmatprep.subr.bf16.mxu0 0
        %406 = vmatpush1.bf16.msra.mxu0 0
        %407 = vmatprep.subr.bf16.mxu0 0
        %408 = vmatpush1.bf16.msra.mxu0 0
        %409 = vmatprep.subr.bf16.mxu0 0
        %410 = vmatpush1.bf16.msra.mxu0 0
        %411 = vmatprep.subr.bf16.mxu0 0
        %412 = vmatpush1.bf16.msra.mxu0 0
        %413 = vmatprep.subr.bf16.mxu0 0
        %414 = vmatpush1.bf16.msra.mxu0 0
        %415 = vmatprep.subr.bf16.mxu0 0
        %416 = vmatpush1.bf16.msra.mxu0 0
        %417 = vmatprep.subr.bf16.mxu0 0
        %418 = vmatpush1.bf16.msra.mxu0 0
        %419 = vmatprep.mubr.bf16.mxu0 0
        %420 = vmatmul.mubr.bf16.gmra.mrb[0].mxu0 %v385
        %v421 = vpop.f32.mrb[0].mxu0
        %v422 = vadd.f32 0.0, %v421
        %v423 = vpop.f32.mrb[0].mxu0
        %v424 = vpop.f32.mrb[0].mxu0
        %v425 = vadd.f32 0.0, %v424
        %v426 = vpop.f32.mrb[0].mxu0
        %427 = vdwg.mxu0
        %v428 = vld [vmem:[#allocation8] sm:$0xf]
        %v429 = vld [vmem:[#allocation8 + $0x4] sm:$0xf]
        %v430 = vld [vmem:[#allocation8 + $0x8] sm:$0xf]
        %v431 = vld [vmem:[#allocation8 + $0xc] sm:$0xf]
        %v436 = vunpack.c.l.b16 %v428
        %v437 = vunpack.c.l.b16 %v429
        %v438 = vunpack.c.l.b16 %v430
        %v439 = vunpack.c.l.b16 %v431
        %v440 = vpack.c.b16 %v437, %v436
        %v441 = vpack.c.b16 %v439, %v438
        %v445 = vsel %vm383, %v365, 0
        %v448 = vsel %vm383, %v366, 0
        %450 = vmatprep.subr.bf16.mxu0 0
        %451 = vmatpush1.bf16.msra.mxu0 %v440
        %452 = vmatprep.subr.bf16.mxu0 0
        %453 = vmatpush1.bf16.msra.mxu0 %v441
        %454 = vmatprep.subr.bf16.mxu0 0
        %455 = vmatpush1.bf16.msra.mxu0 0
        %456 = vmatprep.subr.bf16.mxu0 0
        %457 = vmatpush1.bf16.msra.mxu0 0
        %458 = vmatprep.subr.bf16.mxu0 0
        %459 = vmatpush1.bf16.msra.mxu0 0
        %460 = vmatprep.subr.bf16.mxu0 0
        %461 = vmatpush1.bf16.msra.mxu0 0
        %462 = vmatprep.subr.bf16.mxu0 0
        %463 = vmatpush1.bf16.msra.mxu0 0
        %464 = vmatprep.subr.bf16.mxu0 0
        %465 = vmatpush1.bf16.msra.mxu0 0
        %466 = vmatprep.subr.bf16.mxu0 0
        %467 = vmatpush1.bf16.msra.mxu0 0
        %468 = vmatprep.subr.bf16.mxu0 0
        %469 = vmatpush1.bf16.msra.mxu0 0
        %470 = vmatprep.subr.bf16.mxu0 0
        %471 = vmatpush1.bf16.msra.mxu0 0
        %472 = vmatprep.subr.bf16.mxu0 0
        %473 = vmatpush1.bf16.msra.mxu0 0
        %474 = vmatprep.subr.bf16.mxu0 0
        %475 = vmatpush1.bf16.msra.mxu0 0
        %476 = vmatprep.subr.bf16.mxu0 0
        %477 = vmatpush1.bf16.msra.mxu0 0
        %478 = vmatprep.subr.bf16.mxu0 0
        %479 = vmatpush1.bf16.msra.mxu0 0
        %480 = vmatprep.subr.bf16.mxu0 0
        %481 = vmatpush1.bf16.msra.mxu0 0
        %482 = vmatprep.mubr.bf16.mxu0 0
        %483 = vmatmul.mubr.bf16.gmra.mrb[0].mxu0 %v445
        %v484 = vpop.f32.mrb[0].mxu0
        %v485 = vadd.f32 0.0, %v484
        %v486 = vpop.f32.mrb[0].mxu0
        %v487 = vpop.f32.mrb[0].mxu0
        %v488 = vadd.f32 0.0, %v487
        %v489 = vpop.f32.mrb[0].mxu0
        %490 = vmatprep.mubr.bf16.mxu0 0
        %491 = vmatmul.mubr.bf16.gmra.mrb[0].mxu0 %v448
        %v492 = vpop.f32.mrb[0].mxu0
        %v493 = vadd.f32 0.0, %v492
        %v494 = vpop.f32.mrb[0].mxu0
        %v495 = vpop.f32.mrb[0].mxu0
        %v496 = vadd.f32 0.0, %v495
        %v497 = vpop.f32.mrb[0].mxu0
        %498 = vdwg.mxu0
        %v499 = vmul.f32 %v422, 0.35355338
        %v500 = vmul.f32 %v425, 0.35355338
        %v501 = vpack.c.bf16 %v499, %v499
        %v502 = vpack.c.bf16 %v500, %v500
        %v503 = vpack.c.bf16 %v488, %v485
        %v504 = vpack.c.bf16 %v496, %v493
        %vm505 = vcmask 64512
        %v507 = vsel %vm505, %v501, 0
        %v510 = vsel %vm505, %v503, 0
        %512 = vmatprep.subr.bf16.mxu0 0
        %513 = vmatpush1.bf16.xpose.msra.mxu0 %v510
        %514 = vmatprep.subr.bf16.mxu0 0
        %515 = vmatpush1.bf16.xpose.msra.mxu0 0
        %516 = vmatprep.subr.bf16.mxu0 0
        %517 = vmatpush1.bf16.xpose.msra.mxu0 0
        %518 = vmatprep.subr.bf16.mxu0 0
        %519 = vmatpush1.bf16.xpose.msra.mxu0 0
        %520 = vmatprep.subr.bf16.mxu0 0
        %521 = vmatpush1.bf16.xpose.msra.mxu0 0
        %522 = vmatprep.subr.bf16.mxu0 0
        %523 = vmatpush1.bf16.xpose.msra.mxu0 0
        %524 = vmatprep.subr.bf16.mxu0 0
        %525 = vmatpush1.bf16.xpose.msra.mxu0 0
        %526 = vmatprep.subr.bf16.mxu0 0
        %527 = vmatpush1.bf16.xpose.msra.mxu0 0
        %528 = vmatprep.subr.bf16.mxu0 0
        %529 = vmatpush1.bf16.xpose.msra.mxu0 0
        %530 = vmatprep.subr.bf16.mxu0 0
        %531 = vmatpush1.bf16.xpose.msra.mxu0 0
        %532 = vmatprep.subr.bf16.mxu0 0
        %533 = vmatpush1.bf16.xpose.msra.mxu0 0
        %534 = vmatprep.subr.bf16.mxu0 0
        %535 = vmatpush1.bf16.xpose.msra.mxu0 0
        %536 = vmatprep.subr.bf16.mxu0 0
        %537 = vmatpush1.bf16.xpose.msra.mxu0 0
        %538 = vmatprep.subr.bf16.mxu0 0
        %539 = vmatpush1.bf16.xpose.msra.mxu0 0
        %540 = vmatprep.subr.bf16.mxu0 0
        %541 = vmatpush1.bf16.xpose.msra.mxu0 0
        %542 = vmatprep.subr.bf16.mxu0 0
        %543 = vmatpush1.bf16.xpose.msra.mxu0 0
        %544 = vmatprep.mubr.bf16.mxu0 0
        %545 = vmatmul.mubr.bf16.gmra.mrb[0].mxu0 %v507
        %v546 = vpop.f32.mrb[0].mxu0
        %v547 = vadd.f32 0.0, %v546
        %v548 = vpop.f32.mrb[0].mxu0
        %v549 = vpop.f32.mrb[0].mxu0
        %v550 = vpop.f32.mrb[0].mxu0
        %551 = vdwg.mxu0
        %v553 = vsel %vm505, %v502, 0
        %v556 = vsel %vm505, %v504, 0
        %558 = vmatprep.subr.bf16.mxu0 0
        %559 = vmatpush1.bf16.xpose.msra.mxu0 %v556
        %560 = vmatprep.subr.bf16.mxu0 0
        %561 = vmatpush1.bf16.xpose.msra.mxu0 0
        %562 = vmatprep.subr.bf16.mxu0 0
        %563 = vmatpush1.bf16.xpose.msra.mxu0 0
        %564 = vmatprep.subr.bf16.mxu0 0
        %565 = vmatpush1.bf16.xpose.msra.mxu0 0
        %566 = vmatprep.subr.bf16.mxu0 0
        %567 = vmatpush1.bf16.xpose.msra.mxu0 0
        %568 = vmatprep.subr.bf16.mxu0 0
        %569 = vmatpush1.bf16.xpose.msra.mxu0 0
        %570 = vmatprep.subr.bf16.mxu0 0
        %571 = vmatpush1.bf16.xpose.msra.mxu0 0
        %572 = vmatprep.subr.bf16.mxu0 0
        %573 = vmatpush1.bf16.xpose.msra.mxu0 0
        %574 = vmatprep.subr.bf16.mxu0 0
        %575 = vmatpush1.bf16.xpose.msra.mxu0 0
        %576 = vmatprep.subr.bf16.mxu0 0
        %577 = vmatpush1.bf16.xpose.msra.mxu0 0
        %578 = vmatprep.subr.bf16.mxu0 0
        %579 = vmatpush1.bf16.xpose.msra.mxu0 0
        %580 = vmatprep.subr.bf16.mxu0 0
        %581 = vmatpush1.bf16.xpose.msra.mxu0 0
        %582 = vmatprep.subr.bf16.mxu0 0
        %583 = vmatpush1.bf16.xpose.msra.mxu0 0
        %584 = vmatprep.subr.bf16.mxu0 0
        %585 = vmatpush1.bf16.xpose.msra.mxu0 0
        %586 = vmatprep.subr.bf16.mxu0 0
        %587 = vmatpush1.bf16.xpose.msra.mxu0 0
        %588 = vmatprep.subr.bf16.mxu0 0
        %589 = vmatpush1.bf16.xpose.msra.mxu0 0
        %590 = vmatprep.mubr.bf16.mxu0 0
        %591 = vmatmul.mubr.bf16.gmra.mrb[0].mxu0 %v553
        %v592 = vpop.f32.mrb[0].mxu0
        %v593 = vadd.f32 0.0, %v592
        %v594 = vpop.f32.mrb[0].mxu0
        %v595 = vpop.f32.mrb[0].mxu0
        %v596 = vpop.f32.mrb[0].mxu0
        %597 = vdwg.mxu0
        %vm598 = vcmask 130048
        %v599 = vsel %vm598, %v547, -inf
        %600 = vmax.xlane.f32.xlu0 %v599
        %v601 = vpop.xlane.xlu0 %600
        %v602 = vsel %vm598, %v593, -inf
        %603 = vmax.xlane.f32.xlu0 %v602
        %v604 = vpop.xlane.xlu0 %603
        %v605 = vsub.f32 %v547, %v601
        %v606 = vsub.f32 %v593, %v604
        %v607 = vmul.f32 %v605, 1.442695
        %v608 = vpow.pop %v607
        %v609 = vmul.f32 %v606, 1.442695
        %v610 = vpow.pop %v609
        %v611 = vsel %vm598, %v608, 0.0
        %612 = vadd.xlane.f32.xlu0 %v611
        %v613 = vpop.xlane.xlu0 %612
        %v614 = vsel %vm598, %v610, 0.0
        %615 = vadd.xlane.f32.xlu0 %v614
        %v616 = vpop.xlane.xlu0 %615
        %v617 = vrcp.pop %v613
        %v618 = vrcp.pop %v616
        %v619 = vmul.f32 %v608, %v617
        %v620 = vmul.f32 %v610, %v618
        %v621 = vpack.c.bf16 %v619, %v619
        %v622 = vpack.c.bf16 %v620, %v620
        %624 = vrot.lane.b32.xlu0 %v503, 96
        %v625 = vpop.permute.xlu0 %624
        %v628 = vsel %vm598, %v621, 0
        %630 = vmatprep.subr.bf16.mxu0 0
        %631 = vmatpush1.bf16.msra.mxu0 %v625
        %632 = vmatprep.subr.bf16.mxu0 0
        %633 = vmatpush1.bf16.msra.mxu0 0
        %634 = vmatprep.subr.bf16.mxu0 0
        %635 = vmatpush1.bf16.msra.mxu0 0
        %636 = vmatprep.subr.bf16.mxu0 0
        %637 = vmatpush1.bf16.msra.mxu0 0
        %638 = vmatprep.subr.bf16.mxu0 0
        %639 = vmatpush1.bf16.msra.mxu0 0
        %640 = vmatprep.subr.bf16.mxu0 0
        %641 = vmatpush1.bf16.msra.mxu0 0
        %642 = vmatprep.subr.bf16.mxu0 0
        %643 = vmatpush1.bf16.msra.mxu0 0
        %644 = vmatprep.subr.bf16.mxu0 0
        %645 = vmatpush1.bf16.msra.mxu0 0
        %646 = vmatprep.subr.bf16.mxu0 0
        %647 = vmatpush1.bf16.msra.mxu0 0
        %648 = vmatprep.subr.bf16.mxu0 0
        %649 = vmatpush1.bf16.msra.mxu0 0
        %650 = vmatprep.subr.bf16.mxu0 0
        %651 = vmatpush1.bf16.msra.mxu0 0
        %652 = vmatprep.subr.bf16.mxu0 0
        %653 = vmatpush1.bf16.msra.mxu0 0
        %654 = vmatprep.subr.bf16.mxu0 0
        %655 = vmatpush1.bf16.msra.mxu0 0
        %656 = vmatprep.subr.bf16.mxu0 0
        %657 = vmatpush1.bf16.msra.mxu0 0
        %658 = vmatprep.subr.bf16.mxu0 0
        %659 = vmatpush1.bf16.msra.mxu0 0
        %660 = vmatprep.subr.bf16.mxu0 0
        %661 = vmatpush1.bf16.msra.mxu0 0
        %662 = vmatprep.mubr.bf16.mxu0 0
        %663 = vmatmul.mubr.bf16.gmra.mrb[0].mxu0 %v628
        %v664 = vpop.f32.mrb[0].mxu0
        %v665 = vadd.f32 0.0, %v664
        %v666 = vpop.f32.mrb[0].mxu0
        %v667 = vpop.f32.mrb[0].mxu0
        %v668 = vpop.f32.mrb[0].mxu0
        %669 = vdwg.mxu0
        %671 = vrot.lane.b32.xlu0 %v504, 96
        %v672 = vpop.permute.xlu0 %671
        %v675 = vsel %vm598, %v622, 0
        %677 = vmatprep.subr.bf16.mxu0 0
        %678 = vmatpush1.bf16.msra.mxu0 %v672
        %679 = vmatprep.subr.bf16.mxu0 0
        %680 = vmatpush1.bf16.msra.mxu0 0
        %681 = vmatprep.subr.bf16.mxu0 0
        %682 = vmatpush1.bf16.msra.mxu0 0
        %683 = vmatprep.subr.bf16.mxu0 0
        %684 = vmatpush1.bf16.msra.mxu0 0
        %685 = vmatprep.subr.bf16.mxu0 0
        %686 = vmatpush1.bf16.msra.mxu0 0
        %687 = vmatprep.subr.bf16.mxu0 0
        %688 = vmatpush1.bf16.msra.mxu0 0
        %689 = vmatprep.subr.bf16.mxu0 0
        %690 = vmatpush1.bf16.msra.mxu0 0
        %691 = vmatprep.subr.bf16.mxu0 0
        %692 = vmatpush1.bf16.msra.mxu0 0
        %693 = vmatprep.subr.bf16.mxu0 0
        %694 = vmatpush1.bf16.msra.mxu0 0
        %695 = vmatprep.subr.bf16.mxu0 0
        %696 = vmatpush1.bf16.msra.mxu0 0
        %697 = vmatprep.subr.bf16.mxu0 0
        %698 = vmatpush1.bf16.msra.mxu0 0
        %699 = vmatprep.subr.bf16.mxu0 0
        %700 = vmatpush1.bf16.msra.mxu0 0
        %701 = vmatprep.subr.bf16.mxu0 0
        %702 = vmatpush1.bf16.msra.mxu0 0
        %703 = vmatprep.subr.bf16.mxu0 0
        %704 = vmatpush1.bf16.msra.mxu0 0
        %705 = vmatprep.subr.bf16.mxu0 0
        %706 = vmatpush1.bf16.msra.mxu0 0
        %707 = vmatprep.subr.bf16.mxu0 0
        %708 = vmatpush1.bf16.msra.mxu0 0
        %709 = vmatprep.mubr.bf16.mxu0 0
        %710 = vmatmul.mubr.bf16.gmra.mrb[0].mxu0 %v675
        %v711 = vpop.f32.mrb[0].mxu0
        %v712 = vadd.f32 0.0, %v711
        %v713 = vpop.f32.mrb[0].mxu0
        %v714 = vpop.f32.mrb[0].mxu0
        %v715 = vpop.f32.mrb[0].mxu0
        %716 = vdwg.mxu0
        %v717 = vpack.c.bf16 %v712, %v665
        %v718 = vld [vmem:[#allocation10] sm:$0xf]
        %720 = vrot.lane.b32.xlu0 %v501, 120
        %v721 = vpop.permute.xlu0 %720
        %722 = vrot.lane.b32.xlu0 %v503, 120
        %v723 = vpop.permute.xlu0 %722
        %v725 = vsel %vm505, %v721, 0
        %v728 = vsel %vm505, %v723, 0
        %730 = vmatprep.subr.bf16.mxu0 0
        %731 = vmatpush1.bf16.xpose.msra.mxu0 %v728
        %732 = vmatprep.subr.bf16.mxu0 0
        %733 = vmatpush1.bf16.xpose.msra.mxu0 0
        %734 = vmatprep.subr.bf16.mxu0 0
        %735 = vmatpush1.bf16.xpose.msra.mxu0 0
        %736 = vmatprep.subr.bf16.mxu0 0
        %737 = vmatpush1.bf16.xpose.msra.mxu0 0
        %738 = vmatprep.subr.bf16.mxu0 0
        %739 = vmatpush1.bf16.xpose.msra.mxu0 0
        %740 = vmatprep.subr.bf16.mxu0 0
        %741 = vmatpush1.bf16.xpose.msra.mxu0 0
        %742 = vmatprep.subr.bf16.mxu0 0
        %743 = vmatpush1.bf16.xpose.msra.mxu0 0
        %744 = vmatprep.subr.bf16.mxu0 0
        %745 = vmatpush1.bf16.xpose.msra.mxu0 0
        %746 = vmatprep.subr.bf16.mxu0 0
        %747 = vmatpush1.bf16.xpose.msra.mxu0 0
        %748 = vmatprep.subr.bf16.mxu0 0
        %749 = vmatpush1.bf16.xpose.msra.mxu0 0
        %750 = vmatprep.subr.bf16.mxu0 0
        %751 = vmatpush1.bf16.xpose.msra.mxu0 0
        %752 = vmatprep.subr.bf16.mxu0 0
        %753 = vmatpush1.bf16.xpose.msra.mxu0 0
        %754 = vmatprep.subr.bf16.mxu0 0
        %755 = vmatpush1.bf16.xpose.msra.mxu0 0
        %756 = vmatprep.subr.bf16.mxu0 0
        %757 = vmatpush1.bf16.xpose.msra.mxu0 0
        %758 = vmatprep.subr.bf16.mxu0 0
        %759 = vmatpush1.bf16.xpose.msra.mxu0 0
        %760 = vmatprep.subr.bf16.mxu0 0
        %761 = vmatpush1.bf16.xpose.msra.mxu0 0
        %762 = vmatprep.mubr.bf16.mxu0 0
        %763 = vmatmul.mubr.bf16.gmra.mrb[0].mxu0 %v725
        %v764 = vpop.f32.mrb[0].mxu0
        %v765 = vadd.f32 0.0, %v764
        %v766 = vpop.f32.mrb[0].mxu0
        %v767 = vpop.f32.mrb[0].mxu0
        %v768 = vpop.f32.mrb[0].mxu0
        %769 = vdwg.mxu0
        %771 = vrot.lane.b32.xlu0 %v502, 120
        %v772 = vpop.permute.xlu0 %771
        %773 = vrot.lane.b32.xlu0 %v504, 120
        %v774 = vpop.permute.xlu0 %773
        %v776 = vsel %vm505, %v772, 0
        %v779 = vsel %vm505, %v774, 0
        %781 = vmatprep.subr.bf16.mxu0 0
        %782 = vmatpush1.bf16.xpose.msra.mxu0 %v779
        %783 = vmatprep.subr.bf16.mxu0 0
        %784 = vmatpush1.bf16.xpose.msra.mxu0 0
        %785 = vmatprep.subr.bf16.mxu0 0
        %786 = vmatpush1.bf16.xpose.msra.mxu0 0
        %787 = vmatprep.subr.bf16.mxu0 0
        %788 = vmatpush1.bf16.xpose.msra.mxu0 0
        %789 = vmatprep.subr.bf16.mxu0 0
        %790 = vmatpush1.bf16.xpose.msra.mxu0 0
        %791 = vmatprep.subr.bf16.mxu0 0
        %792 = vmatpush1.bf16.xpose.msra.mxu0 0
        %793 = vmatprep.subr.bf16.mxu0 0
        %794 = vmatpush1.bf16.xpose.msra.mxu0 0
        %795 = vmatprep.subr.bf16.mxu0 0
        %796 = vmatpush1.bf16.xpose.msra.mxu0 0
        %797 = vmatprep.subr.bf16.mxu0 0
        %798 = vmatpush1.bf16.xpose.msra.mxu0 0
        %799 = vmatprep.subr.bf16.mxu0 0
        %800 = vmatpush1.bf16.xpose.msra.mxu0 0
        %801 = vmatprep.subr.bf16.mxu0 0
        %802 = vmatpush1.bf16.xpose.msra.mxu0 0
        %803 = vmatprep.subr.bf16.mxu0 0
        %804 = vmatpush1.bf16.xpose.msra.mxu0 0
        %805 = vmatprep.subr.bf16.mxu0 0
        %806 = vmatpush1.bf16.xpose.msra.mxu0 0
        %807 = vmatprep.subr.bf16.mxu0 0
        %808 = vmatpush1.bf16.xpose.msra.mxu0 0
        %809 = vmatprep.subr.bf16.mxu0 0
        %810 = vmatpush1.bf16.xpose.msra.mxu0 0
        %811 = vmatprep.subr.bf16.mxu0 0
        %812 = vmatpush1.bf16.xpose.msra.mxu0 0
        %813 = vmatprep.mubr.bf16.mxu0 0
        %814 = vmatmul.mubr.bf16.gmra.mrb[0].mxu0 %v776
        %v815 = vpop.f32.mrb[0].mxu0
        %v816 = vadd.f32 0.0, %v815
        %v817 = vpop.f32.mrb[0].mxu0
        %v818 = vpop.f32.mrb[0].mxu0
        %v819 = vpop.f32.mrb[0].mxu0
        %820 = vdwg.mxu0
        %v821 = vsel %vm598, %v765, -inf
        %822 = vmax.xlane.f32.xlu0 %v821
        %v823 = vpop.xlane.xlu0 %822
        %v824 = vsel %vm598, %v816, -inf
        %825 = vmax.xlane.f32.xlu0 %v824
        %v826 = vpop.xlane.xlu0 %825
        %v827 = vsub.f32 %v765, %v823
        %v828 = vsub.f32 %v816, %v826
        %v829 = vmul.f32 %v827, 1.442695
        %v830 = vpow.pop %v829
        %v831 = vmul.f32 %v828, 1.442695
        %v832 = vpow.pop %v831
        %v833 = vsel %vm598, %v830, 0.0
        %834 = vadd.xlane.f32.xlu0 %v833
        %v835 = vpop.xlane.xlu0 %834
        %v836 = vsel %vm598, %v832, 0.0
        %837 = vadd.xlane.f32.xlu0 %v836
        %v838 = vpop.xlane.xlu0 %837
        %v839 = vrcp.pop %v835
        %v840 = vrcp.pop %v838
        %v841 = vmul.f32 %v830, %v839
        %v842 = vmul.f32 %v832, %v840
        %v843 = vpack.c.bf16 %v841, %v841
        %v844 = vpack.c.bf16 %v842, %v842
        %845 = vrot.lane.b32.xlu0 %v503, 88
        %v846 = vpop.permute.xlu0 %845
        %v849 = vsel %vm598, %v843, 0
        %851 = vmatprep.subr.bf16.mxu0 0
        %852 = vmatpush1.bf16.msra.mxu0 %v846
        %853 = vmatprep.subr.bf16.mxu0 0
        %854 = vmatpush1.bf16.msra.mxu0 0
        %855 = vmatprep.subr.bf16.mxu0 0
        %856 = vmatpush1.bf16.msra.mxu0 0
        %857 = vmatprep.subr.bf16.mxu0 0
        %858 = vmatpush1.bf16.msra.mxu0 0
        %859 = vmatprep.subr.bf16.mxu0 0
        %860 = vmatpush1.bf16.msra.mxu0 0
        %861 = vmatprep.subr.bf16.mxu0 0
        %862 = vmatpush1.bf16.msra.mxu0 0
        %863 = vmatprep.subr.bf16.mxu0 0
        %864 = vmatpush1.bf16.msra.mxu0 0
        %865 = vmatprep.subr.bf16.mxu0 0
        %866 = vmatpush1.bf16.msra.mxu0 0
        %867 = vmatprep.subr.bf16.mxu0 0
        %868 = vmatpush1.bf16.msra.mxu0 0
        %869 = vmatprep.subr.bf16.mxu0 0
        %870 = vmatpush1.bf16.msra.mxu0 0
        %871 = vmatprep.subr.bf16.mxu0 0
        %872 = vmatpush1.bf16.msra.mxu0 0
        %873 = vmatprep.subr.bf16.mxu0 0
        %874 = vmatpush1.bf16.msra.mxu0 0
        %875 = vmatprep.subr.bf16.mxu0 0
        %876 = vmatpush1.bf16.msra.mxu0 0
        %877 = vmatprep.subr.bf16.mxu0 0
        %878 = vmatpush1.bf16.msra.mxu0 0
        %879 = vmatprep.subr.bf16.mxu0 0
        %880 = vmatpush1.bf16.msra.mxu0 0
        %881 = vmatprep.subr.bf16.mxu0 0
        %882 = vmatpush1.bf16.msra.mxu0 0
        %883 = vmatprep.mubr.bf16.mxu0 0
        %884 = vmatmul.mubr.bf16.gmra.mrb[0].mxu0 %v849
        %v885 = vpop.f32.mrb[0].mxu0
        %v886 = vadd.f32 0.0, %v885
        %v887 = vpop.f32.mrb[0].mxu0
        %v888 = vpop.f32.mrb[0].mxu0
        %v889 = vpop.f32.mrb[0].mxu0
        %890 = vdwg.mxu0
        %891 = vrot.lane.b32.xlu0 %v504, 88
        %v892 = vpop.permute.xlu0 %891
        %v895 = vsel %vm598, %v844, 0
        %897 = vmatprep.subr.bf16.mxu0 0
        %898 = vmatpush1.bf16.msra.mxu0 %v892
        %899 = vmatprep.subr.bf16.mxu0 0
        %900 = vmatpush1.bf16.msra.mxu0 0
        %901 = vmatprep.subr.bf16.mxu0 0
        %902 = vmatpush1.bf16.msra.mxu0 0
        %903 = vmatprep.subr.bf16.mxu0 0
        %904 = vmatpush1.bf16.msra.mxu0 0
        %905 = vmatprep.subr.bf16.mxu0 0
        %906 = vmatpush1.bf16.msra.mxu0 0
        %907 = vmatprep.subr.bf16.mxu0 0
        %908 = vmatpush1.bf16.msra.mxu0 0
        %909 = vmatprep.subr.bf16.mxu0 0
        %910 = vmatpush1.bf16.msra.mxu0 0
        %911 = vmatprep.subr.bf16.mxu0 0
        %912 = vmatpush1.bf16.msra.mxu0 0
        %913 = vmatprep.subr.bf16.mxu0 0
        %914 = vmatpush1.bf16.msra.mxu0 0
        %915 = vmatprep.subr.bf16.mxu0 0
        %916 = vmatpush1.bf16.msra.mxu0 0
        %917 = vmatprep.subr.bf16.mxu0 0
        %918 = vmatpush1.bf16.msra.mxu0 0
        %919 = vmatprep.subr.bf16.mxu0 0
        %920 = vmatpush1.bf16.msra.mxu0 0
        %921 = vmatprep.subr.bf16.mxu0 0
        %922 = vmatpush1.bf16.msra.mxu0 0
        %923 = vmatprep.subr.bf16.mxu0 0
        %924 = vmatpush1.bf16.msra.mxu0 0
        %925 = vmatprep.subr.bf16.mxu0 0
        %926 = vmatpush1.bf16.msra.mxu0 0
        %927 = vmatprep.subr.bf16.mxu0 0
        %928 = vmatpush1.bf16.msra.mxu0 0
        %929 = vmatprep.mubr.bf16.mxu0 0
        %930 = vmatmul.mubr.bf16.gmra.mrb[0].mxu0 %v895
        %v931 = vpop.f32.mrb[0].mxu0
        %v932 = vadd.f32 0.0, %v931
        %v933 = vpop.f32.mrb[0].mxu0
        %v934 = vpop.f32.mrb[0].mxu0
        %v935 = vpop.f32.mrb[0].mxu0
        %936 = vdwg.mxu0
        %v937 = vpack.c.bf16 %v932, %v886
        %v938 = vld [vmem:[#allocation10 + $0x4] sm:$0xf]
        %v940 = vsel %vm505, %v937, 0
        %vm942 = vcmask 1043456
        %v944 = vsel %vm942, %v938, 0
        %946 = vmatprep.subr.bf16.mxu0 0
        %947 = vmatpush1.bf16.msra.mxu0 %v944
        %948 = vmatprep.subr.bf16.mxu0 0
        %949 = vmatpush1.bf16.msra.mxu0 0
        %950 = vmatprep.subr.bf16.mxu0 0
        %951 = vmatpush1.bf16.msra.mxu0 0
        %952 = vmatprep.subr.bf16.mxu0 0
        %953 = vmatpush1.bf16.msra.mxu0 0
        %954 = vmatprep.subr.bf16.mxu0 0
        %955 = vmatpush1.bf16.msra.mxu0 0
        %956 = vmatprep.subr.bf16.mxu0 0
        %957 = vmatpush1.bf16.msra.mxu0 0
        %958 = vmatprep.subr.bf16.mxu0 0
        %959 = vmatpush1.bf16.msra.mxu0 0
        %960 = vmatprep.subr.bf16.mxu0 0
        %961 = vmatpush1.bf16.msra.mxu0 0
        %962 = vmatprep.subr.bf16.mxu0 0
        %963 = vmatpush1.bf16.msra.mxu0 0
        %964 = vmatprep.subr.bf16.mxu0 0
        %965 = vmatpush1.bf16.msra.mxu0 0
        %966 = vmatprep.subr.bf16.mxu0 0
        %967 = vmatpush1.bf16.msra.mxu0 0
        %968 = vmatprep.subr.bf16.mxu0 0
        %969 = vmatpush1.bf16.msra.mxu0 0
        %970 = vmatprep.subr.bf16.mxu0 0
        %971 = vmatpush1.bf16.msra.mxu0 0
        %972 = vmatprep.subr.bf16.mxu0 0
        %973 = vmatpush1.bf16.msra.mxu0 0
        %974 = vmatprep.subr.bf16.mxu0 0
        %975 = vmatpush1.bf16.msra.mxu0 0
        %976 = vmatprep.subr.bf16.mxu0 0
        %977 = vmatpush1.bf16.msra.mxu0 0
        %978 = vmatprep.mubr.bf16.mxu0 0
        %979 = vmatmul.mubr.bf16.gmra.mrb[0].mxu0 %v940
        %v980 = vpop.f32.mrb[0].mxu0
        %v981 = vadd.f32 0.0, %v980
        %v982 = vpop.f32.mrb[0].mxu0
        %v983 = vpop.f32.mrb[0].mxu0
        %v984 = vadd.f32 0.0, %v983
        %v985 = vpop.f32.mrb[0].mxu0
        %986 = vdwg.mxu0
        %v988 = vsel %vm505, %v717, 0
        %v991 = vsel %vm942, %v718, 0
        %993 = vmatprep.subr.bf16.mxu0 0
        %994 = vmatpush1.bf16.msra.mxu0 %v991
        %995 = vmatprep.subr.bf16.mxu0 0
        %996 = vmatpush1.bf16.msra.mxu0 0
        %997 = vmatprep.subr.bf16.mxu0 0
        %998 = vmatpush1.bf16.msra.mxu0 0
        %999 = vmatprep.subr.bf16.mxu0 0
        %1000 = vmatpush1.bf16.msra.mxu0 0
        %1001 = vmatprep.subr.bf16.mxu0 0
        %1002 = vmatpush1.bf16.msra.mxu0 0
        %1003 = vmatprep.subr.bf16.mxu0 0
        %1004 = vmatpush1.bf16.msra.mxu0 0
        %1005 = vmatprep.subr.bf16.mxu0 0
        %1006 = vmatpush1.bf16.msra.mxu0 0
        %1007 = vmatprep.subr.bf16.mxu0 0
        %1008 = vmatpush1.bf16.msra.mxu0 0
        %1009 = vmatprep.subr.bf16.mxu0 0
        %1010 = vmatpush1.bf16.msra.mxu0 0
        %1011 = vmatprep.subr.bf16.mxu0 0
        %1012 = vmatpush1.bf16.msra.mxu0 0
        %1013 = vmatprep.subr.bf16.mxu0 0
        %1014 = vmatpush1.bf16.msra.mxu0 0
        %1015 = vmatprep.subr.bf16.mxu0 0
        %1016 = vmatpush1.bf16.msra.mxu0 0
        %1017 = vmatprep.subr.bf16.mxu0 0
        %1018 = vmatpush1.bf16.msra.mxu0 0
        %1019 = vmatprep.subr.bf16.mxu0 0
        %1020 = vmatpush1.bf16.msra.mxu0 0
        %1021 = vmatprep.subr.bf16.mxu0 0
        %1022 = vmatpush1.bf16.msra.mxu0 0
        %1023 = vmatprep.subr.bf16.mxu0 0
        %1024 = vmatpush1.bf16.msra.mxu0 0
        %1025 = vmatprep.mubr.bf16.mxu0 0
        %1026 = vmatmul.mubr.bf16.gmra.mrb[0].mxu0 %v988
        %v1027 = vpop.f32.mrb[0].mxu0
        %v1028 = vadd.f32 %v981, %v1027
        %v1029 = vpop.f32.mrb[0].mxu0
        %v1030 = vpop.f32.mrb[0].mxu0
        %v1031 = vadd.f32 %v984, %v1030
        %v1032 = vpop.f32.mrb[0].mxu0
        %1033 = vdwg.mxu0
        %1034 = vrot.lane.b32.xlu0 %v501, 112
        %v1035 = vpop.permute.xlu0 %1034
        %1036 = vrot.lane.b32.xlu0 %v503, 112
        %v1037 = vpop.permute.xlu0 %1036
        %v1039 = vsel %vm505, %v1035, 0
        %v1042 = vsel %vm505, %v1037, 0
        %1044 = vmatprep.subr.bf16.mxu0 0
        %1045 = vmatpush1.bf16.xpose.msra.mxu0 %v1042
        %1046 = vmatprep.subr.bf16.mxu0 0
        %1047 = vmatpush1.bf16.xpose.msra.mxu0 0
        %1048 = vmatprep.subr.bf16.mxu0 0
        %1049 = vmatpush1.bf16.xpose.msra.mxu0 0
        %1050 = vmatprep.subr.bf16.mxu0 0
        %1051 = vmatpush1.bf16.xpose.msra.mxu0 0
        %1052 = vmatprep.subr.bf16.mxu0 0
        %1053 = vmatpush1.bf16.xpose.msra.mxu0 0
        %1054 = vmatprep.subr.bf16.mxu0 0
        %1055 = vmatpush1.bf16.xpose.msra.mxu0 0
        %1056 = vmatprep.subr.bf16.mxu0 0
        %1057 = vmatpush1.bf16.xpose.msra.mxu0 0
        %1058 = vmatprep.subr.bf16.mxu0 0
        %1059 = vmatpush1.bf16.xpose.msra.mxu0 0
        %1060 = vmatprep.subr.bf16.mxu0 0
        %1061 = vmatpush1.bf16.xpose.msra.mxu0 0
        %1062 = vmatprep.subr.bf16.mxu0 0
        %1063 = vmatpush1.bf16.xpose.msra.mxu0 0
        %1064 = vmatprep.subr.bf16.mxu0 0
        %1065 = vmatpush1.bf16.xpose.msra.mxu0 0
        %1066 = vmatprep.subr.bf16.mxu0 0
        %1067 = vmatpush1.bf16.xpose.msra.mxu0 0
        %1068 = vmatprep.subr.bf16.mxu0 0
        %1069 = vmatpush1.bf16.xpose.msra.mxu0 0
        %1070 = vmatprep.subr.bf16.mxu0 0
        %1071 = vmatpush1.bf16.xpose.msra.mxu0 0
        %1072 = vmatprep.subr.bf16.mxu0 0
        %1073 = vmatpush1.bf16.xpose.msra.mxu0 0
        %1074 = vmatprep.subr.bf16.mxu0 0
        %1075 = vmatpush1.bf16.xpose.msra.mxu0 0
        %1076 = vmatprep.mubr.bf16.mxu0 0
        %1077 = vmatmul.mubr.bf16.gmra.mrb[0].mxu0 %v1039
        %v1078 = vpop.f32.mrb[0].mxu0
        %v1079 = vadd.f32 0.0, %v1078
        %v1080 = vpop.f32.mrb[0].mxu0
        %v1081 = vpop.f32.mrb[0].mxu0
        %v1082 = vpop.f32.mrb[0].mxu0
        %1083 = vdwg.mxu0
        %1084 = vrot.lane.b32.xlu0 %v502, 112
        %v1085 = vpop.permute.xlu0 %1084
        %1086 = vrot.lane.b32.xlu0 %v504, 112
        %v1087 = vpop.permute.xlu0 %1086
        %v1089 = vsel %vm505, %v1085, 0
        %v1092 = vsel %vm505, %v1087, 0
        %1094 = vmatprep.subr.bf16.mxu0 0
        %1095 = vmatpush1.bf16.xpose.msra.mxu0 %v1092
        %1096 = vmatprep.subr.bf16.mxu0 0
        %1097 = vmatpush1.bf16.xpose.msra.mxu0 0
        %1098 = vmatprep.subr.bf16.mxu0 0
        %1099 = vmatpush1.bf16.xpose.msra.mxu0 0
        %1100 = vmatprep.subr.bf16.mxu0 0
        %1101 = vmatpush1.bf16.xpose.msra.mxu0 0
        %1102 = vmatprep.subr.bf16.mxu0 0
        %1103 = vmatpush1.bf16.xpose.msra.mxu0 0
        %1104 = vmatprep.subr.bf16.mxu0 0
        %1105 = vmatpush1.bf16.xpose.msra.mxu0 0
        %1106 = vmatprep.subr.bf16.mxu0 0
        %1107 = vmatpush1.bf16.xpose.msra.mxu0 0
        %1108 = vmatprep.subr.bf16.mxu0 0
        %1109 = vmatpush1.bf16.xpose.msra.mxu0 0
        %1110 = vmatprep.subr.bf16.mxu0 0
        %1111 = vmatpush1.bf16.xpose.msra.mxu0 0
        %1112 = vmatprep.subr.bf16.mxu0 0
        %1113 = vmatpush1.bf16.xpose.msra.mxu0 0
        %1114 = vmatprep.subr.bf16.mxu0 0
        %1115 = vmatpush1.bf16.xpose.msra.mxu0 0
        %1116 = vmatprep.subr.bf16.mxu0 0
        %1117 = vmatpush1.bf16.xpose.msra.mxu0 0
        %1118 = vmatprep.subr.bf16.mxu0 0
        %1119 = vmatpush1.bf16.xpose.msra.mxu0 0
        %1120 = vmatprep.subr.bf16.mxu0 0
        %1121 = vmatpush1.bf16.xpose.msra.mxu0 0
        %1122 = vmatprep.subr.bf16.mxu0 0
        %1123 = vmatpush1.bf16.xpose.msra.mxu0 0
        %1124 = vmatprep.subr.bf16.mxu0 0
        %1125 = vmatpush1.bf16.xpose.msra.mxu0 0
        %1126 = vmatprep.mubr.bf16.mxu0 0
        %1127 = vmatmul.mubr.bf16.gmra.mrb[0].mxu0 %v1089
        %v1128 = vpop.f32.mrb[0].mxu0
        %v1129 = vadd.f32 0.0, %v1128
        %v1130 = vpop.f32.mrb[0].mxu0
        %v1131 = vpop.f32.mrb[0].mxu0
        %v1132 = vpop.f32.mrb[0].mxu0
        %1133 = vdwg.mxu0
        %v1134 = vsel %vm598, %v1079, -inf
        %1135 = vmax.xlane.f32.xlu0 %v1134
        %v1136 = vpop.xlane.xlu0 %1135
        %v1137 = vsel %vm598, %v1129, -inf
        %1138 = vmax.xlane.f32.xlu0 %v1137
        %v1139 = vpop.xlane.xlu0 %1138
        %v1140 = vsub.f32 %v1079, %v1136
        %v1141 = vsub.f32 %v1129, %v1139
        %v1142 = vmul.f32 %v1140, 1.442695
        %v1143 = vpow.pop %v1142
        %v1144 = vmul.f32 %v1141, 1.442695
        %v1145 = vpow.pop %v1144
        %v1146 = vsel %vm598, %v1143, 0.0
        %1147 = vadd.xlane.f32.xlu0 %v1146
        %v1148 = vpop.xlane.xlu0 %1147
        %v1149 = vsel %vm598, %v1145, 0.0
        %1150 = vadd.xlane.f32.xlu0 %v1149
        %v1151 = vpop.xlane.xlu0 %1150
        %v1152 = vrcp.pop %v1148
        %v1153 = vrcp.pop %v1151
        %v1154 = vmul.f32 %v1143, %v1152
        %v1155 = vmul.f32 %v1145, %v1153
        %v1156 = vpack.c.bf16 %v1154, %v1154
        %v1157 = vpack.c.bf16 %v1155, %v1155
        %1158 = vrot.lane.b32.xlu0 %v503, 80
        %v1159 = vpop.permute.xlu0 %1158
        %v1162 = vsel %vm598, %v1156, 0
        %1164 = vmatprep.subr.bf16.mxu0 0
        %1165 = vmatpush1.bf16.msra.mxu0 %v1159
        %1166 = vmatprep.subr.bf16.mxu0 0
        %1167 = vmatpush1.bf16.msra.mxu0 0
        %1168 = vmatprep.subr.bf16.mxu0 0
        %1169 = vmatpush1.bf16.msra.mxu0 0
        %1170 = vmatprep.subr.bf16.mxu0 0
        %1171 = vmatpush1.bf16.msra.mxu0 0
        %1172 = vmatprep.subr.bf16.mxu0 0
        %1173 = vmatpush1.bf16.msra.mxu0 0
        %1174 = vmatprep.subr.bf16.mxu0 0
        %1175 = vmatpush1.bf16.msra.mxu0 0
        %1176 = vmatprep.subr.bf16.mxu0 0
        %1177 = vmatpush1.bf16.msra.mxu0 0
        %1178 = vmatprep.subr.bf16.mxu0 0
        %1179 = vmatpush1.bf16.msra.mxu0 0
        %1180 = vmatprep.subr.bf16.mxu0 0
        %1181 = vmatpush1.bf16.msra.mxu0 0
        %1182 = vmatprep.subr.bf16.mxu0 0
        %1183 = vmatpush1.bf16.msra.mxu0 0
        %1184 = vmatprep.subr.bf16.mxu0 0
        %1185 = vmatpush1.bf16.msra.mxu0 0
        %1186 = vmatprep.subr.bf16.mxu0 0
        %1187 = vmatpush1.bf16.msra.mxu0 0
        %1188 = vmatprep.subr.bf16.mxu0 0
        %1189 = vmatpush1.bf16.msra.mxu0 0
        %1190 = vmatprep.subr.bf16.mxu0 0
        %1191 = vmatpush1.bf16.msra.mxu0 0
        %1192 = vmatprep.subr.bf16.mxu0 0
        %1193 = vmatpush1.bf16.msra.mxu0 0
        %1194 = vmatprep.subr.bf16.mxu0 0
        %1195 = vmatpush1.bf16.msra.mxu0 0
        %1196 = vmatprep.mubr.bf16.mxu0 0
        %1197 = vmatmul.mubr.bf16.gmra.mrb[0].mxu0 %v1162
        %v1198 = vpop.f32.mrb[0].mxu0
        %v1199 = vadd.f32 0.0, %v1198
        %v1200 = vpop.f32.mrb[0].mxu0
        %v1201 = vpop.f32.mrb[0].mxu0
        %v1202 = vpop.f32.mrb[0].mxu0
        %1203 = vdwg.mxu0
        %1204 = vrot.lane.b32.xlu0 %v504, 80
        %v1205 = vpop.permute.xlu0 %1204
        %v1208 = vsel %vm598, %v1157, 0
        %1210 = vmatprep.subr.bf16.mxu0 0
        %1211 = vmatpush1.bf16.msra.mxu0 %v1205
        %1212 = vmatprep.subr.bf16.mxu0 0
        %1213 = vmatpush1.bf16.msra.mxu0 0
        %1214 = vmatprep.subr.bf16.mxu0 0
        %1215 = vmatpush1.bf16.msra.mxu0 0
        %1216 = vmatprep.subr.bf16.mxu0 0
        %1217 = vmatpush1.bf16.msra.mxu0 0
        %1218 = vmatprep.subr.bf16.mxu0 0
        %1219 = vmatpush1.bf16.msra.mxu0 0
        %1220 = vmatprep.subr.bf16.mxu0 0
        %1221 = vmatpush1.bf16.msra.mxu0 0
        %1222 = vmatprep.subr.bf16.mxu0 0
        %1223 = vmatpush1.bf16.msra.mxu0 0
        %1224 = vmatprep.subr.bf16.mxu0 0
        %1225 = vmatpush1.bf16.msra.mxu0 0
        %1226 = vmatprep.subr.bf16.mxu0 0
        %1227 = vmatpush1.bf16.msra.mxu0 0
        %1228 = vmatprep.subr.bf16.mxu0 0
        %1229 = vmatpush1.bf16.msra.mxu0 0
        %1230 = vmatprep.subr.bf16.mxu0 0
        %1231 = vmatpush1.bf16.msra.mxu0 0
        %1232 = vmatprep.subr.bf16.mxu0 0
        %1233 = vmatpush1.bf16.msra.mxu0 0
        %1234 = vmatprep.subr.bf16.mxu0 0
        %1235 = vmatpush1.bf16.msra.mxu0 0
        %1236 = vmatprep.subr.bf16.mxu0 0
        %1237 = vmatpush1.bf16.msra.mxu0 0
        %1238 = vmatprep.subr.bf16.mxu0 0
        %1239 = vmatpush1.bf16.msra.mxu0 0
        %1240 = vmatprep.subr.bf16.mxu0 0
        %1241 = vmatpush1.bf16.msra.mxu0 0
        %1242 = vmatprep.mubr.bf16.mxu0 0
        %1243 = vmatmul.mubr.bf16.gmra.mrb[0].mxu0 %v1208
        %v1244 = vpop.f32.mrb[0].mxu0
        %v1245 = vadd.f32 0.0, %v1244
        %v1246 = vpop.f32.mrb[0].mxu0
        %v1247 = vpop.f32.mrb[0].mxu0
        %v1248 = vpop.f32.mrb[0].mxu0
        %1249 = vdwg.mxu0
        %v1250 = vpack.c.bf16 %v1245, %v1199
        %v1251 = vld [vmem:[#allocation10 + $0x8] sm:$0xf]
        %v1253 = vsel %vm505, %v1250, 0
        %v1256 = vsel %vm942, %v1251, 0
        %1258 = vmatprep.subr.bf16.mxu0 0
        %1259 = vmatpush1.bf16.msra.mxu0 %v1256
        %1260 = vmatprep.subr.bf16.mxu0 0
        %1261 = vmatpush1.bf16.msra.mxu0 0
        %1262 = vmatprep.subr.bf16.mxu0 0
        %1263 = vmatpush1.bf16.msra.mxu0 0
        %1264 = vmatprep.subr.bf16.mxu0 0
        %1265 = vmatpush1.bf16.msra.mxu0 0
        %1266 = vmatprep.subr.bf16.mxu0 0
        %1267 = vmatpush1.bf16.msra.mxu0 0
        %1268 = vmatprep.subr.bf16.mxu0 0
        %1269 = vmatpush1.bf16.msra.mxu0 0
        %1270 = vmatprep.subr.bf16.mxu0 0
        %1271 = vmatpush1.bf16.msra.mxu0 0
        %1272 = vmatprep.subr.bf16.mxu0 0
        %1273 = vmatpush1.bf16.msra.mxu0 0
        %1274 = vmatprep.subr.bf16.mxu0 0
        %1275 = vmatpush1.bf16.msra.mxu0 0
        %1276 = vmatprep.subr.bf16.mxu0 0
        %1277 = vmatpush1.bf16.msra.mxu0 0
        %1278 = vmatprep.subr.bf16.mxu0 0
        %1279 = vmatpush1.bf16.msra.mxu0 0
        %1280 = vmatprep.subr.bf16.mxu0 0
        %1281 = vmatpush1.bf16.msra.mxu0 0
        %1282 = vmatprep.subr.bf16.mxu0 0
        %1283 = vmatpush1.bf16.msra.mxu0 0
        %1284 = vmatprep.subr.bf16.mxu0 0
        %1285 = vmatpush1.bf16.msra.mxu0 0
        %1286 = vmatprep.subr.bf16.mxu0 0
        %1287 = vmatpush1.bf16.msra.mxu0 0
        %1288 = vmatprep.subr.bf16.mxu0 0
        %1289 = vmatpush1.bf16.msra.mxu0 0
        %1290 = vmatprep.mubr.bf16.mxu0 0
        %1291 = vmatmul.mubr.bf16.gmra.mrb[0].mxu0 %v1253
        %v1292 = vpop.f32.mrb[0].mxu0
        %v1293 = vadd.f32 0.0, %v1292
        %v1294 = vpop.f32.mrb[0].mxu0
        %v1295 = vpop.f32.mrb[0].mxu0
        %v1296 = vadd.f32 0.0, %v1295
        %v1297 = vpop.f32.mrb[0].mxu0
        %1298 = vdwg.mxu0
        %v1299 = vadd.f32 %v1028, %v1293
        %v1300 = vadd.f32 %v1031, %v1296
        %1301 = vrot.lane.b32.xlu0 %v501, 104
        %v1302 = vpop.permute.xlu0 %1301
        %1303 = vrot.lane.b32.xlu0 %v503, 104
        %v1304 = vpop.permute.xlu0 %1303
        %v1306 = vsel %vm505, %v1302, 0
        %v1309 = vsel %vm505, %v1304, 0
        %1311 = vmatprep.subr.bf16.mxu0 0
        %1312 = vmatpush1.bf16.xpose.msra.mxu0 %v1309
        %1313 = vmatprep.subr.bf16.mxu0 0
        %1314 = vmatpush1.bf16.xpose.msra.mxu0 0
        %1315 = vmatprep.subr.bf16.mxu0 0
        %1316 = vmatpush1.bf16.xpose.msra.mxu0 0
        %1317 = vmatprep.subr.bf16.mxu0 0
        %1318 = vmatpush1.bf16.xpose.msra.mxu0 0
        %1319 = vmatprep.subr.bf16.mxu0 0
        %1320 = vmatpush1.bf16.xpose.msra.mxu0 0
        %1321 = vmatprep.subr.bf16.mxu0 0
        %1322 = vmatpush1.bf16.xpose.msra.mxu0 0
        %1323 = vmatprep.subr.bf16.mxu0 0
        %1324 = vmatpush1.bf16.xpose.msra.mxu0 0
        %1325 = vmatprep.subr.bf16.mxu0 0
        %1326 = vmatpush1.bf16.xpose.msra.mxu0 0
        %1327 = vmatprep.subr.bf16.mxu0 0
        %1328 = vmatpush1.bf16.xpose.msra.mxu0 0
        %1329 = vmatprep.subr.bf16.mxu0 0
        %1330 = vmatpush1.bf16.xpose.msra.mxu0 0
        %1331 = vmatprep.subr.bf16.mxu0 0
        %1332 = vmatpush1.bf16.xpose.msra.mxu0 0
        %1333 = vmatprep.subr.bf16.mxu0 0
        %1334 = vmatpush1.bf16.xpose.msra.mxu0 0
        %1335 = vmatprep.subr.bf16.mxu0 0
        %1336 = vmatpush1.bf16.xpose.msra.mxu0 0
        %1337 = vmatprep.subr.bf16.mxu0 0
        %1338 = vmatpush1.bf16.xpose.msra.mxu0 0
        %1339 = vmatprep.subr.bf16.mxu0 0
        %1340 = vmatpush1.bf16.xpose.msra.mxu0 0
        %1341 = vmatprep.subr.bf16.mxu0 0
        %1342 = vmatpush1.bf16.xpose.msra.mxu0 0
        %1343 = vmatprep.mubr.bf16.mxu0 0
        %1344 = vmatmul.mubr.bf16.gmra.mrb[0].mxu0 %v1306
        %v1345 = vpop.f32.mrb[0].mxu0
        %v1346 = vadd.f32 0.0, %v1345
        %v1347 = vpop.f32.mrb[0].mxu0
        %v1348 = vpop.f32.mrb[0].mxu0
        %v1349 = vpop.f32.mrb[0].mxu0
        %1350 = vdwg.mxu0
        %1351 = vrot.lane.b32.xlu0 %v502, 104
        %v1352 = vpop.permute.xlu0 %1351
        %1353 = vrot.lane.b32.xlu0 %v504, 104
        %v1354 = vpop.permute.xlu0 %1353
        %v1356 = vsel %vm505, %v1352, 0
        %v1359 = vsel %vm505, %v1354, 0
        %1361 = vmatprep.subr.bf16.mxu0 0
        %1362 = vmatpush1.bf16.xpose.msra.mxu0 %v1359
        %1363 = vmatprep.subr.bf16.mxu0 0
        %1364 = vmatpush1.bf16.xpose.msra.mxu0 0
        %1365 = vmatprep.subr.bf16.mxu0 0
        %1366 = vmatpush1.bf16.xpose.msra.mxu0 0
        %1367 = vmatprep.subr.bf16.mxu0 0
        %1368 = vmatpush1.bf16.xpose.msra.mxu0 0
        %1369 = vmatprep.subr.bf16.mxu0 0
        %1370 = vmatpush1.bf16.xpose.msra.mxu0 0
        %1371 = vmatprep.subr.bf16.mxu0 0
        %1372 = vmatpush1.bf16.xpose.msra.mxu0 0
        %1373 = vmatprep.subr.bf16.mxu0 0
        %1374 = vmatpush1.bf16.xpose.msra.mxu0 0
        %1375 = vmatprep.subr.bf16.mxu0 0
        %1376 = vmatpush1.bf16.xpose.msra.mxu0 0
        %1377 = vmatprep.subr.bf16.mxu0 0
        %1378 = vmatpush1.bf16.xpose.msra.mxu0 0
        %1379 = vmatprep.subr.bf16.mxu0 0
        %1380 = vmatpush1.bf16.xpose.msra.mxu0 0
        %1381 = vmatprep.subr.bf16.mxu0 0
        %1382 = vmatpush1.bf16.xpose.msra.mxu0 0
        %1383 = vmatprep.subr.bf16.mxu0 0
        %1384 = vmatpush1.bf16.xpose.msra.mxu0 0
        %1385 = vmatprep.subr.bf16.mxu0 0
        %1386 = vmatpush1.bf16.xpose.msra.mxu0 0
        %1387 = vmatprep.subr.bf16.mxu0 0
        %1388 = vmatpush1.bf16.xpose.msra.mxu0 0
        %1389 = vmatprep.subr.bf16.mxu0 0
        %1390 = vmatpush1.bf16.xpose.msra.mxu0 0
        %1391 = vmatprep.subr.bf16.mxu0 0
        %1392 = vmatpush1.bf16.xpose.msra.mxu0 0
        %1393 = vmatprep.mubr.bf16.mxu0 0
        %1394 = vmatmul.mubr.bf16.gmra.mrb[0].mxu0 %v1356
        %v1395 = vpop.f32.mrb[0].mxu0
        %v1396 = vadd.f32 0.0, %v1395
        %v1397 = vpop.f32.mrb[0].mxu0
        %v1398 = vpop.f32.mrb[0].mxu0
        %v1399 = vpop.f32.mrb[0].mxu0
        %1400 = vdwg.mxu0
        %v1401 = vsel %vm598, %v1346, -inf
        %1402 = vmax.xlane.f32.xlu0 %v1401
        %v1403 = vpop.xlane.xlu0 %1402
        %v1404 = vsel %vm598, %v1396, -inf
        %1405 = vmax.xlane.f32.xlu0 %v1404
        %v1406 = vpop.xlane.xlu0 %1405
        %v1407 = vsub.f32 %v1346, %v1403
        %v1408 = vsub.f32 %v1396, %v1406
        %v1409 = vmul.f32 %v1407, 1.442695
        %v1410 = vpow.pop %v1409
        %v1411 = vmul.f32 %v1408, 1.442695
        %v1412 = vpow.pop %v1411
        %v1413 = vsel %vm598, %v1410, 0.0
        %1414 = vadd.xlane.f32.xlu0 %v1413
        %v1415 = vpop.xlane.xlu0 %1414
        %v1416 = vsel %vm598, %v1412, 0.0
        %1417 = vadd.xlane.f32.xlu0 %v1416
        %v1418 = vpop.xlane.xlu0 %1417
        %v1419 = vrcp.pop %v1415
        %v1420 = vrcp.pop %v1418
        %v1421 = vmul.f32 %v1410, %v1419
        %v1422 = vmul.f32 %v1412, %v1420
        %v1423 = vpack.c.bf16 %v1421, %v1421
        %v1424 = vpack.c.bf16 %v1422, %v1422
        %1425 = vrot.lane.b32.xlu0 %v503, 72
        %v1426 = vpop.permute.xlu0 %1425
        %v1429 = vsel %vm598, %v1423, 0
        %1431 = vmatprep.subr.bf16.mxu0 0
        %1432 = vmatpush1.bf16.msra.mxu0 %v1426
        %1433 = vmatprep.subr.bf16.mxu0 0
        %1434 = vmatpush1.bf16.msra.mxu0 0
        %1435 = vmatprep.subr.bf16.mxu0 0
        %1436 = vmatpush1.bf16.msra.mxu0 0
        %1437 = vmatprep.subr.bf16.mxu0 0
        %1438 = vmatpush1.bf16.msra.mxu0 0
        %1439 = vmatprep.subr.bf16.mxu0 0
        %1440 = vmatpush1.bf16.msra.mxu0 0
        %1441 = vmatprep.subr.bf16.mxu0 0
        %1442 = vmatpush1.bf16.msra.mxu0 0
        %1443 = vmatprep.subr.bf16.mxu0 0
        %1444 = vmatpush1.bf16.msra.mxu0 0
        %1445 = vmatprep.subr.bf16.mxu0 0
        %1446 = vmatpush1.bf16.msra.mxu0 0
        %1447 = vmatprep.subr.bf16.mxu0 0
        %1448 = vmatpush1.bf16.msra.mxu0 0
        %1449 = vmatprep.subr.bf16.mxu0 0
        %1450 = vmatpush1.bf16.msra.mxu0 0
        %1451 = vmatprep.subr.bf16.mxu0 0
        %1452 = vmatpush1.bf16.msra.mxu0 0
        %1453 = vmatprep.subr.bf16.mxu0 0
        %1454 = vmatpush1.bf16.msra.mxu0 0
        %1455 = vmatprep.subr.bf16.mxu0 0
        %1456 = vmatpush1.bf16.msra.mxu0 0
        %1457 = vmatprep.subr.bf16.mxu0 0
        %1458 = vmatpush1.bf16.msra.mxu0 0
        %1459 = vmatprep.subr.bf16.mxu0 0
        %1460 = vmatpush1.bf16.msra.mxu0 0
        %1461 = vmatprep.subr.bf16.mxu0 0
        %1462 = vmatpush1.bf16.msra.mxu0 0
        %1463 = vmatprep.mubr.bf16.mxu0 0
        %1464 = vmatmul.mubr.bf16.gmra.mrb[0].mxu0 %v1429
        %v1465 = vpop.f32.mrb[0].mxu0
        %v1466 = vadd.f32 0.0, %v1465
        %v1467 = vpop.f32.mrb[0].mxu0
        %v1468 = vpop.f32.mrb[0].mxu0
        %v1469 = vpop.f32.mrb[0].mxu0
        %1470 = vdwg.mxu0
        %1471 = vrot.lane.b32.xlu0 %v504, 72
        %v1472 = vpop.permute.xlu0 %1471
        %v1475 = vsel %vm598, %v1424, 0
        %1477 = vmatprep.subr.bf16.mxu0 0
        %1478 = vmatpush1.bf16.msra.mxu0 %v1472
        %1479 = vmatprep.subr.bf16.mxu0 0
        %1480 = vmatpush1.bf16.msra.mxu0 0
        %1481 = vmatprep.subr.bf16.mxu0 0
        %1482 = vmatpush1.bf16.msra.mxu0 0
        %1483 = vmatprep.subr.bf16.mxu0 0
        %1484 = vmatpush1.bf16.msra.mxu0 0
        %1485 = vmatprep.subr.bf16.mxu0 0
        %1486 = vmatpush1.bf16.msra.mxu0 0
        %1487 = vmatprep.subr.bf16.mxu0 0
        %1488 = vmatpush1.bf16.msra.mxu0 0
        %1489 = vmatprep.subr.bf16.mxu0 0
        %1490 = vmatpush1.bf16.msra.mxu0 0
        %1491 = vmatprep.subr.bf16.mxu0 0
        %1492 = vmatpush1.bf16.msra.mxu0 0
        %1493 = vmatprep.subr.bf16.mxu0 0
        %1494 = vmatpush1.bf16.msra.mxu0 0
        %1495 = vmatprep.subr.bf16.mxu0 0
        %1496 = vmatpush1.bf16.msra.mxu0 0
        %1497 = vmatprep.subr.bf16.mxu0 0
        %1498 = vmatpush1.bf16.msra.mxu0 0
        %1499 = vmatprep.subr.bf16.mxu0 0
        %1500 = vmatpush1.bf16.msra.mxu0 0
        %1501 = vmatprep.subr.bf16.mxu0 0
        %1502 = vmatpush1.bf16.msra.mxu0 0
        %1503 = vmatprep.subr.bf16.mxu0 0
        %1504 = vmatpush1.bf16.msra.mxu0 0
        %1505 = vmatprep.subr.bf16.mxu0 0
        %1506 = vmatpush1.bf16.msra.mxu0 0
        %1507 = vmatprep.subr.bf16.mxu0 0
        %1508 = vmatpush1.bf16.msra.mxu0 0
        %1509 = vmatprep.mubr.bf16.mxu0 0
        %1510 = vmatmul.mubr.bf16.gmra.mrb[0].mxu0 %v1475
        %v1511 = vpop.f32.mrb[0].mxu0
        %v1512 = vadd.f32 0.0, %v1511
        %v1513 = vpop.f32.mrb[0].mxu0
        %v1514 = vpop.f32.mrb[0].mxu0
        %v1515 = vpop.f32.mrb[0].mxu0
        %1516 = vdwg.mxu0
        %v1517 = vpack.c.bf16 %v1512, %v1466
        %v1518 = vld [vmem:[#allocation10 + $0xc] sm:$0xf]
        %v1520 = vsel %vm505, %v1517, 0
        %v1523 = vsel %vm942, %v1518, 0
        %1525 = vmatprep.subr.bf16.mxu0 0
        %1526 = vmatpush1.bf16.msra.mxu0 %v1523
        %1527 = vmatprep.subr.bf16.mxu0 0
        %1528 = vmatpush1.bf16.msra.mxu0 0
        %1529 = vmatprep.subr.bf16.mxu0 0
        %1530 = vmatpush1.bf16.msra.mxu0 0
        %1531 = vmatprep.subr.bf16.mxu0 0
        %1532 = vmatpush1.bf16.msra.mxu0 0
        %1533 = vmatprep.subr.bf16.mxu0 0
        %1534 = vmatpush1.bf16.msra.mxu0 0
        %1535 = vmatprep.subr.bf16.mxu0 0
        %1536 = vmatpush1.bf16.msra.mxu0 0
        %1537 = vmatprep.subr.bf16.mxu0 0
        %1538 = vmatpush1.bf16.msra.mxu0 0
        %1539 = vmatprep.subr.bf16.mxu0 0
        %1540 = vmatpush1.bf16.msra.mxu0 0
        %1541 = vmatprep.subr.bf16.mxu0 0
        %1542 = vmatpush1.bf16.msra.mxu0 0
        %1543 = vmatprep.subr.bf16.mxu0 0
        %1544 = vmatpush1.bf16.msra.mxu0 0
        %1545 = vmatprep.subr.bf16.mxu0 0
        %1546 = vmatpush1.bf16.msra.mxu0 0
        %1547 = vmatprep.subr.bf16.mxu0 0
        %1548 = vmatpush1.bf16.msra.mxu0 0
        %1549 = vmatprep.subr.bf16.mxu0 0
        %1550 = vmatpush1.bf16.msra.mxu0 0
        %1551 = vmatprep.subr.bf16.mxu0 0
        %1552 = vmatpush1.bf16.msra.mxu0 0
        %1553 = vmatprep.subr.bf16.mxu0 0
        %1554 = vmatpush1.bf16.msra.mxu0 0
        %1555 = vmatprep.subr.bf16.mxu0 0
        %1556 = vmatpush1.bf16.msra.mxu0 0
        %1557 = vmatprep.mubr.bf16.mxu0 0
        %1558 = vmatmul.mubr.bf16.gmra.mrb[0].mxu0 %v1520
        %v1559 = vpop.f32.mrb[0].mxu0
        %v1560 = vadd.f32 0.0, %v1559
        %v1561 = vpop.f32.mrb[0].mxu0
        %v1562 = vpop.f32.mrb[0].mxu0
        %v1563 = vadd.f32 0.0, %v1562
        %v1564 = vpop.f32.mrb[0].mxu0
        %1565 = vdwg.mxu0
        %v1566 = vadd.f32 %v1299, %v1560
        %v1567 = vadd.f32 %v1300, %v1563
        %v1568 = vld [vmem:[%s5] sm:$0x1]
        %v1570 = vlaneseq
        %v1571 = vshrl.u32 %v1570, 7
        %v1572 = vsub.s32 0, %v1571
        %v1573 = vrot.slane %v1568, %v1572
        %v1575 = vadd.f32 %v1566, %v1573
        %v1576 = vadd.f32 %v1567, %v1573
        %1577 = vst.msk [vmem:[%s353] sm:$0xff] %vm383, %v1575
        %1578 = vst.msk [vmem:[%s353 + $0x8] sm:$0xff] %vm383, %v1576
        %s1579 = sand.u32 %s171, 1
        %s1580 = scalar_lea.sflag [#allocation4], %s1579
        %s1581 = sand.u32 %s171, 1
        %s1582 = smul.addr %s1581, 16
        %s1583 = scalar_lea.vmem [#allocation11], %s1582
        // Predicated region
        $region65: #{tpu_custom_call.1} parent=43 // pred_check
          %p1584 = pneg %p181
        $region66: #{tpu_custom_call.1} parent=43 // pred_check_branch
          %1586 = sbr.rel (%p1584) target = $region68
        $region67: #{tpu_custom_call.1} parent=43 // pred_region
          %s1587 = smul.u32 2, %s27
          %s1589 = ssub.s32 256, 256
          %1590 = vsyncadd %s1580, %s1589
          %s1591 = smul.addr %s1587, 128
          %s1592 = scalar_lea.hbm %s6, %s1591
          %s1593 = sshll.u32 %s1583, 4
          %s1594 = int_to_ptr.vmem [resolvable:$true] %s1593
          %1599 = dma.vmem_to_hbm [thread:$0]  %s1594, 256, %s1592, %s1580, 128, 128, 8
        $region68: #{tpu_custom_call.1} parent=43 // pred_fallthru
          _
      $region44: #{tpu_custom_call.1} parent=5 // pred_fallthru
        _
      %p1600 = scmp.le.s32.totalorder 2, %s22
      // Predicated region
      $region69: #{tpu_custom_call.1} parent=5 // pred_check
        %p1601 = pneg %p1600
      $region70: #{tpu_custom_call.1} parent=5 // pred_check_branch
        %1603 = sbr.rel (%p1601) target = $region72
      $region71: #{tpu_custom_call.1} parent=5 // pred_region
        %s1604 = ssub.s32 %s22, 2
        // Predicated region
        $region73: #{tpu_custom_call.1} parent=71 // pred_check
          %p1605 = pneg %p187
        $region74: #{tpu_custom_call.1} parent=71 // pred_check_branch
          %1607 = sbr.rel (%p1605) target = $region76
        $region75: #{tpu_custom_call.1} parent=71 // pred_region
          %s1608 = sand.u32 %s172, 1
          %s1609 = scalar_lea.sflag [#allocation4], %s1608
          %s1610 = sand.u32 %s172, 1
          %s1611 = smul.addr %s1610, 16
          %s1612 = scalar_lea.vmem [#allocation11], %s1611
          %1613 = dma.done %s1609, 256
        $region76: #{tpu_custom_call.1} parent=71 // pred_fallthru
          _
      $region72: #{tpu_custom_call.1} parent=5 // pred_fallthru
        _
    $region6: #{tpu_custom_call.1} parent=1 // loop_footer
      %s26 = sadd.s32 1, %s22
    $region7: #{tpu_custom_call.1} parent=1 // loop_footer_branch
      %21 = sbr.rel target = $region3
    $region8: #{tpu_custom_call.1} parent=1 // loop_exit
      _
    %1614 = vsyncpa [#allocation3], 1
    %s1615 = scalar_lea.sflag [#allocation3], 1
    %1616 = vsyncpa %s1615, 1
    %1617 = vsyncpa [#allocation6], 1
    %s1618 = scalar_lea.sflag [#allocation6], 1
    %1619 = vsyncpa %s1618, 1
    %1620 = vsyncpa [#allocation9], 1
    %1621 = vsyncpa [#allocation4], 1
    %s1622 = scalar_lea.sflag [#allocation4], 1
    %1623 = vsyncpa %s1622, 1

</llo_original>
